<compile_context>
chip_gen: v7x
topology: tpu7x:2x2x1
jax: 0.10.0
libtpu: 0.0.40
codegen_flags: <defaults>
</compile_context>

<pallas_src>
import jax
import jax.numpy as jnp
from jax.experimental import pallas as pl
from jax.experimental.pallas import tpu as pltpu

KSIZE = 3          # conv kernel size (shape=3 in the module)
POOL = 2           # MaxPool2d(pooling=2)
BN_EPS = 1e-5      # nn.BatchNorm2d default eps


def conv_im2col_kernel(x_ref, w_ref, conv_ref, sum_ref, sumsq_ref, xpad_ref):
    """Per-image: zero-pad in VMEM, build one im2col slab, single dense-K MXU matmul,
    and emit per-image BN partial statistics.

    x_ref:     (H, W, Cin)      one image, NHWC (batch dim squeezed by BlockSpec)
    w_ref:     (9*Cin, Cout)    conv weight, rows ordered (ky, kx, ci)
    conv_ref:  (H*W, Cout)      f32 conv output for this image
    sum_ref:   (1, Cout)        per-image channel sums
    sumsq_ref: (1, Cout)        per-image channel sums of squares
    xpad_ref:  (H+2, W+2, Cin)  VMEM scratch (zero-padded image)
    """
    H, W, Cin = x_ref.shape

    # In-kernel zero padding (replaces a separate XLA pad pass over HBM).
    xpad_ref[...] = jnp.zeros_like(xpad_ref)
    xpad_ref[1:H + 1, 1:W + 1, :] = x_ref[...]
    xp = xpad_ref[...]

    # im2col: one (H*W, 9*Cin) slab -> a single dense-K matmul instead of 9 K=Cin dots.
    cols = []
    for ky in range(KSIZE):
        for kx in range(KSIZE):
            cols.append(xp[ky:ky + H, kx:kx + W, :].reshape(H * W, Cin))
    slab = jnp.concatenate(cols, axis=-1)                                   # (H*W, 9*Cin)

    acc = jnp.dot(slab, w_ref[...], preferred_element_type=jnp.float32)     # (H*W, Cout) f32
    conv_ref[...] = acc

    # One-pass BN statistics. Conv bias is omitted entirely: the batch-mean subtraction in
    # training-mode BN cancels a per-channel bias exactly, so it cannot change the output.
    sum_ref[...] = jnp.sum(acc, axis=0, keepdims=True)
    sumsq_ref[...] = jnp.sum(acc * acc, axis=0, keepdims=True)


def bn_relu_pool_kernel(conv_ref, sum_ref, sumsq_ref, gamma_ref, beta_ref, out_ref):
    """Per-image: fold BN(batch stats) + ReLU into one scale/shift/max pass, then 2x2 max-pool
    via lane retiles so the final store is a single lane-dense block.

    conv_ref:  (H*W, Cout) f32       this image's conv output
    sum_ref:   (N, 1, Cout)          per-image partial sums (full array, shared)
    sumsq_ref: (N, 1, Cout)          per-image partial sums of squares
    gamma_ref: (1, Cout), beta_ref: (1, Cout)
    out_ref:   (Hp, Wp*Cout)         lane-dense pooled output for this image
    """
    HW, Cout = conv_ref.shape
    Nb = sum_ref.shape[0]
    inv_count = 1.0 / float(Nb * HW)

    # Global batch statistics from the per-image partial sums (tiny: N x Cout).
    tot = jnp.sum(sum_ref[...], axis=0)            # (1, Cout)
    tot2 = jnp.sum(sumsq_ref[...], axis=0)         # (1, Cout)
    mean = tot * inv_count
    var = tot2 * inv_count - mean * mean

    # Fold gamma / rsqrt / mean / beta into a single per-channel scale & shift; fuse ReLU.
    scale = gamma_ref[...] * jax.lax.rsqrt(var + BN_EPS)
    shift = beta_ref[...] - mean * scale
    y = jnp.maximum(conv_ref[...] * scale + shift, 0.0)          # (H*W, Cout), 2 VPU ops/elem

    # 2x2 max-pool, stride 2. Rows of y are ordered (h, w) with Cout on lanes, so each pool
    # step is a (2n, m) -> (n, 2m) lane retile followed by a max of the two lane halves.
    wpc = out_ref.shape[-1]                                      # Wp * Cout
    t = y.reshape(HW // POOL, POOL * Cout)                       # row = h*Wp + j, lanes = (w%2, c)
    wmax = jnp.maximum(t[:, :Cout], t[:, Cout:])                 # (H*Wp, Cout)   W-pairs pooled
    u = wmax.reshape(out_ref.shape[0], POOL * wpc)               # row = hp,      lanes = (h%2, j, c)
    out_ref[...] = jnp.maximum(u[:, :wpc], u[:, wpc:])           # (Hp, Wp*Cout)  one dense store


def conv2d_block(x_nchw, w_oihw, bias, gamma, beta, *, compute_dtype=None):
    """NCHW in, NCHW out; matches torch Conv_2d.forward of a freshly-built module
    (training-mode BatchNorm, i.e. batch statistics)."""
    N, Cin, H, W = x_nchw.shape
    Cout = w_oihw.shape[0]
    assert H % POOL == 0 and W % POOL == 0, "even spatial dims expected for MaxPool2d(2)"
    Hp, Wp = H // POOL, W // POOL

    # Conv bias is not passed to the kernels: BN's batch-mean subtraction cancels it exactly.
    del bias

    # Glue: NCHW -> NHWC (channels on lanes) and (ky*kx*ci, co) weight matrix for the im2col dot.
    x_nhwc = jnp.transpose(x_nchw, (0, 2, 3, 1))
    w2 = jnp.transpose(w_oihw, (2, 3, 1, 0)).reshape(KSIZE * KSIZE * Cin, Cout)
    if compute_dtype is not None:          # e.g. jnp.bfloat16 on v6e/v7x to halve input HBM bytes
        x_nhwc = x_nhwc.astype(compute_dtype)
        w2 = w2.astype(compute_dtype)

    # Pass 1: per-image conv (grid over batch, megacore-parallel) + per-image BN partial stats.
    # (For large H one would additionally tile rows with a 1-row halo; unnecessary at this size.)
    conv_out, sums, sumsqs = pl.pallas_call(
        conv_im2col_kernel,
        grid=(N,),
        in_specs=[
            pl.BlockSpec((None, H, W, Cin), lambda n: (n, 0, 0, 0)),
            pl.BlockSpec((KSIZE * KSIZE * Cin, Cout), lambda n: (0, 0)),
        ],
        out_specs=(
            pl.BlockSpec((None, H * W, Cout), lambda n: (n, 0, 0)),
            pl.BlockSpec((None, 1, Cout), lambda n: (n, 0, 0)),
            pl.BlockSpec((None, 1, Cout), lambda n: (n, 0, 0)),
        ),
        out_shape=(
            jax.ShapeDtypeStruct((N, H * W, Cout), jnp.float32),
            jax.ShapeDtypeStruct((N, 1, Cout), jnp.float32),
            jax.ShapeDtypeStruct((N, 1, Cout), jnp.float32),
        ),
        scratch_shapes=[pltpu.VMEM((H + 2, W + 2, Cin), x_nhwc.dtype)],
        compiler_params=pltpu.CompilerParams(dimension_semantics=("parallel",)),
    )(x_nhwc, w2)

    # Pass 2: finalize BN from global stats, ReLU, 2x2 max-pool, lane-dense output.
    out2d = pl.pallas_call(
        bn_relu_pool_kernel,
        grid=(N,),
        in_specs=[
            pl.BlockSpec((None, H * W, Cout), lambda n: (n, 0, 0)),
            pl.BlockSpec((N, 1, Cout), lambda n: (0, 0, 0)),
            pl.BlockSpec((N, 1, Cout), lambda n: (0, 0, 0)),
            pl.BlockSpec((1, Cout), lambda n: (0, 0)),
            pl.BlockSpec((1, Cout), lambda n: (0, 0)),
        ],
        out_specs=pl.BlockSpec((None, Hp, Wp * Cout), lambda n: (n, 0, 0)),
        out_shape=jax.ShapeDtypeStruct((N, Hp, Wp * Cout), jnp.float32),
        compiler_params=pltpu.CompilerParams(dimension_semantics=("parallel",)),
    )(conv_out, sums, sumsqs, gamma.reshape(1, Cout), beta.reshape(1, Cout))

    out_nhwc = out2d.reshape(N, Hp, Wp, Cout)
    return jnp.transpose(out_nhwc, (0, 3, 1, 2))                 # back to NCHW


def reference(x, w, b, gamma, beta):
    """Pure-JAX reference mirroring the PyTorch module's forward (training-mode BN)."""
    out = jax.lax.conv_general_dilated(
        x, w, window_strides=(1, 1), padding=((1, 1), (1, 1)),
        dimension_numbers=("NCHW", "OIHW", "NCHW"),
        precision=jax.lax.Precision.HIGHEST)
    out = out + b.reshape(1, -1, 1, 1)
    mean = jnp.mean(out, axis=(0, 2, 3), keepdims=True)
    var = jnp.mean((out - mean) ** 2, axis=(0, 2, 3), keepdims=True)
    out = (out - mean) / jnp.sqrt(var + BN_EPS)
    out = out * gamma.reshape(1, -1, 1, 1) + beta.reshape(1, -1, 1, 1)
    out = jnp.maximum(out, 0.0)
    out = jax.lax.reduce_window(out, -jnp.inf, jax.lax.max,
                                (1, 1, POOL, POOL), (1, 1, POOL, POOL), "VALID")
    return out


if __name__ == "__main__":
    # TODO(synk): BatchNorm running-stat (running_mean/var) buffer updates are a training-mode
    # side effect that does not influence the forward output, so they are not modeled.
    N, Cin, Cout, H, W = 2, 4, 8, 16, 16

    key = jax.random.PRNGKey(0)
    kx, kw, kb, kg, kbt = jax.random.split(key, 5)
    x = jax.random.normal(kx, (N, Cin, H, W), dtype=jnp.float32)
    conv_w = 0.1 * jax.random.normal(kw, (Cout, Cin, KSIZE, KSIZE), dtype=jnp.float32)
    conv_b = 0.1 * jax.random.normal(kb, (Cout,), dtype=jnp.float32)
    bn_gamma = 1.0 + 0.1 * jax.random.normal(kg, (Cout,), dtype=jnp.float32)
    bn_beta = 0.1 * jax.random.normal(kbt, (Cout,), dtype=jnp.float32)

    out = conv2d_block(x, conv_w, conv_b, bn_gamma, bn_beta)
    out = jax.block_until_ready(out)

    assert out.shape == (N, Cout, H // POOL, W // POOL), out.shape

    ref = reference(x, conv_w, conv_b, bn_gamma, bn_beta)
    max_err = float(jnp.max(jnp.abs(out - ref)))
    assert max_err < 1e-3, f"max abs error too large: {max_err}"

    print("KERNEL_OK")
</pallas_src>

<mosaic_0001>
module attributes {stable_mosaic.version = 11 : i64} {
  func.func @conv_im2col_kernel(%arg0: i32, %arg1: memref<1x16x16x4xf32, #tpu.memory_space<vmem>>, %arg2: memref<36x8xf32, #tpu.memory_space<vmem>>, %arg3: memref<1x256x8xf32, #tpu.memory_space<vmem>>, %arg4: memref<1x1x8xf32, #tpu.memory_space<vmem>>, %arg5: memref<1x1x8xf32, #tpu.memory_space<vmem>>, %arg6: memref<18x18x4xf32, #tpu.memory_space<vmem>>) attributes {dimension_semantics = [#tpu.dimension_semantics<parallel>], iteration_bounds = array<i64: 2>, scalar_prefetch = 0 : i64, scratch_operands = 1 : i64, tpu.core_type = #tpu.core_type<tc>, window_params = [{transform_indices = @transform_0, window_bounds = array<i64: 1, 16, 16, 4>}, {pipeline_mode = #tpu.pipeline_mode<synchronous>, transform_indices = @transform_1, window_bounds = array<i64: 36, 8>}, {transform_indices = @transform_2, window_bounds = array<i64: 1, 256, 8>}, {transform_indices = @transform_3, window_bounds = array<i64: 1, 1, 8>}, {transform_indices = @transform_4, window_bounds = array<i64: 1, 1, 8>}]} {
    %cst = arith.constant 0.000000e+00 : f32
    %0 = vector.broadcast %cst : f32 to vector<18x18x4xf32>
    %c0 = arith.constant 0 : index
    %c0_0 = arith.constant 0 : index
    %c0_1 = arith.constant 0 : index
    %1 = vector.load %arg6[%c0, %c0_0, %c0_1] : memref<18x18x4xf32, #tpu.memory_space<vmem>>, vector<18x18x4xf32>
    tpu.vector_store %arg6[%c0, %c0_0, %c0_1], %0 {strides = array<i32>} : memref<18x18x4xf32, #tpu.memory_space<vmem>>, vector<18x18x4xf32>,
    %c0_2 = arith.constant 0 : index
    %c0_3 = arith.constant 0 : index
    %c0_4 = arith.constant 0 : index
    %c0_5 = arith.constant 0 : index
    %2 = vector.load %arg1[%c0_2, %c0_3, %c0_4, %c0_5] : memref<1x16x16x4xf32, #tpu.memory_space<vmem>>, vector<1x16x16x4xf32>
    %3 = vector.shape_cast %2 : vector<1x16x16x4xf32> to vector<16x16x4xf32>
    %c1 = arith.constant 1 : index
    %c1_6 = arith.constant 1 : index
    %c0_7 = arith.constant 0 : index
    %4 = vector.load %arg6[%c1, %c1_6, %c0_7] : memref<18x18x4xf32, #tpu.memory_space<vmem>>, vector<16x16x4xf32>
    tpu.vector_store %arg6[%c1, %c1_6, %c0_7], %3 {strides = array<i32>} : memref<18x18x4xf32, #tpu.memory_space<vmem>>, vector<16x16x4xf32>,
    %c0_8 = arith.constant 0 : index
    %c0_9 = arith.constant 0 : index
    %c0_10 = arith.constant 0 : index
    %5 = vector.load %arg6[%c0_8, %c0_9, %c0_10] : memref<18x18x4xf32, #tpu.memory_space<vmem>>, vector<18x18x4xf32>
    %6 = vector.extract_strided_slice %5 {offsets = [0, 0, 0], sizes = [16, 16, 4], strides = [1, 1, 1]} : vector<18x18x4xf32> to vector<16x16x4xf32>
    %7 = vector.shape_cast %6 : vector<16x16x4xf32> to vector<256x4xf32>
    %8 = vector.extract_strided_slice %5 {offsets = [0, 1, 0], sizes = [16, 16, 4], strides = [1, 1, 1]} : vector<18x18x4xf32> to vector<16x16x4xf32>
    %9 = vector.shape_cast %8 : vector<16x16x4xf32> to vector<256x4xf32>
    %10 = vector.extract_strided_slice %5 {offsets = [0, 2, 0], sizes = [16, 16, 4], strides = [1, 1, 1]} : vector<18x18x4xf32> to vector<16x16x4xf32>
    %11 = vector.shape_cast %10 : vector<16x16x4xf32> to vector<256x4xf32>
    %12 = vector.extract_strided_slice %5 {offsets = [1, 0, 0], sizes = [16, 16, 4], strides = [1, 1, 1]} : vector<18x18x4xf32> to vector<16x16x4xf32>
    %13 = vector.shape_cast %12 : vector<16x16x4xf32> to vector<256x4xf32>
    %14 = vector.extract_strided_slice %5 {offsets = [1, 1, 0], sizes = [16, 16, 4], strides = [1, 1, 1]} : vector<18x18x4xf32> to vector<16x16x4xf32>
    %15 = vector.shape_cast %14 : vector<16x16x4xf32> to vector<256x4xf32>
    %16 = vector.extract_strided_slice %5 {offsets = [1, 2, 0], sizes = [16, 16, 4], strides = [1, 1, 1]} : vector<18x18x4xf32> to vector<16x16x4xf32>
    %17 = vector.shape_cast %16 : vector<16x16x4xf32> to vector<256x4xf32>
    %18 = vector.extract_strided_slice %5 {offsets = [2, 0, 0], sizes = [16, 16, 4], strides = [1, 1, 1]} : vector<18x18x4xf32> to vector<16x16x4xf32>
    %19 = vector.shape_cast %18 : vector<16x16x4xf32> to vector<256x4xf32>
    %20 = vector.extract_strided_slice %5 {offsets = [2, 1, 0], sizes = [16, 16, 4], strides = [1, 1, 1]} : vector<18x18x4xf32> to vector<16x16x4xf32>
    %21 = vector.shape_cast %20 : vector<16x16x4xf32> to vector<256x4xf32>
    %22 = vector.extract_strided_slice %5 {offsets = [2, 2, 0], sizes = [16, 16, 4], strides = [1, 1, 1]} : vector<18x18x4xf32> to vector<16x16x4xf32>
    %23 = vector.shape_cast %22 : vector<16x16x4xf32> to vector<256x4xf32>
    %24 = tpu.concatenate %7, %9, %11, %13, %15, %17, %19, %21, %23 in 1 : vector<256x4xf32>, vector<256x4xf32>, vector<256x4xf32>, vector<256x4xf32>, vector<256x4xf32>, vector<256x4xf32>, vector<256x4xf32>, vector<256x4xf32>, vector<256x4xf32> -> vector<256x36xf32>
    %c0_11 = arith.constant 0 : index
    %c0_12 = arith.constant 0 : index
    %25 = vector.load %arg2[%c0_11, %c0_12] : memref<36x8xf32, #tpu.memory_space<vmem>>, vector<36x8xf32>
    %cst_13 = arith.constant dense<0.000000e+00> : vector<256x8xf32>
    %26 = tpu.matmul %24, %25, %cst_13 {dimension_numbers = #tpu.dot_dimension_numbers<[1], [0], [0], [1], [0, 0, 1, 1], [], []>} : vector<256x36xf32>, vector<36x8xf32>, vector<256x8xf32> -> vector<256x8xf32>
    %c0_14 = arith.constant 0 : index
    %c0_15 = arith.constant 0 : index
    %c0_16 = arith.constant 0 : index
    %27 = vector.load %arg3[%c0_14, %c0_15, %c0_16] : memref<1x256x8xf32, #tpu.memory_space<vmem>>, vector<1x256x8xf32>
    %28 = vector.shape_cast %27 : vector<1x256x8xf32> to vector<256x8xf32>
    %29 = vector.shape_cast %26 : vector<256x8xf32> to vector<1x256x8xf32>
    tpu.vector_store %arg3[%c0_14, %c0_15, %c0_16], %29 {strides = array<i32>} : memref<1x256x8xf32, #tpu.memory_space<vmem>>, vector<1x256x8xf32>,
    %cst_17 = arith.constant dense<0.000000e+00> : vector<8xf32>
    %30 = vector.multi_reduction <add>, %26, %cst_17 [0] : vector<256x8xf32> to vector<8xf32>
    %31 = vector.shape_cast %30 : vector<8xf32> to vector<1x8xf32>
    %c0_18 = arith.constant 0 : index
    %c0_19 = arith.constant 0 : index
    %c0_20 = arith.constant 0 : index
    %32 = vector.load %arg4[%c0_18, %c0_19, %c0_20] : memref<1x1x8xf32, #tpu.memory_space<vmem>>, vector<1x1x8xf32>
    %33 = vector.shape_cast %32 : vector<1x1x8xf32> to vector<1x8xf32>
    %34 = vector.shape_cast %31 : vector<1x8xf32> to vector<1x1x8xf32>
    tpu.vector_store %arg4[%c0_18, %c0_19, %c0_20], %34 {strides = array<i32>} : memref<1x1x8xf32, #tpu.memory_space<vmem>>, vector<1x1x8xf32>,
    %35 = arith.mulf %26, %26 : vector<256x8xf32>
    %cst_21 = arith.constant dense<0.000000e+00> : vector<8xf32>
    %36 = vector.multi_reduction <add>, %35, %cst_21 [0] : vector<256x8xf32> to vector<8xf32>
    %37 = vector.shape_cast %36 : vector<8xf32> to vector<1x8xf32>
    %c0_22 = arith.constant 0 : index
    %c0_23 = arith.constant 0 : index
    %c0_24 = arith.constant 0 : index
    %38 = vector.load %arg5[%c0_22, %c0_23, %c0_24] : memref<1x1x8xf32, #tpu.memory_space<vmem>>, vector<1x1x8xf32>
    %39 = vector.shape_cast %38 : vector<1x1x8xf32> to vector<1x8xf32>
    %40 = vector.shape_cast %37 : vector<1x8xf32> to vector<1x1x8xf32>
    tpu.vector_store %arg5[%c0_22, %c0_23, %c0_24], %40 {strides = array<i32>} : memref<1x1x8xf32, #tpu.memory_space<vmem>>, vector<1x1x8xf32>,
    return
  }
  func.func @transform_0(%arg0: i32) -> (i32, i32, i32, i32) {
    %c0_i32 = arith.constant 0 : i32
    %c0_i32_0 = arith.constant 0 : i32
    %c0_i32_1 = arith.constant 0 : i32
    %c0_i32_2 = arith.constant 0 : i32
    return %arg0, %c0_i32, %c0_i32_0, %c0_i32_1 : i32, i32, i32, i32
  }
  func.func @transform_1(%arg0: i32) -> (i32, i32) {
    %c0_i32 = arith.constant 0 : i32
    %c0_i32_0 = arith.constant 0 : i32
    %c0_i32_1 = arith.constant 0 : i32
    return %c0_i32, %c0_i32_0 : i32, i32
  }
  func.func @transform_2(%arg0: i32) -> (i32, i32, i32) {
    %c0_i32 = arith.constant 0 : i32
    %c0_i32_0 = arith.constant 0 : i32
    %c0_i32_1 = arith.constant 0 : i32
    return %arg0, %c0_i32, %c0_i32_0 : i32, i32, i32
  }
  func.func @transform_3(%arg0: i32) -> (i32, i32, i32) {
    %c0_i32 = arith.constant 0 : i32
    %c0_i32_0 = arith.constant 0 : i32
    %c0_i32_1 = arith.constant 0 : i32
    return %arg0, %c0_i32, %c0_i32_0 : i32, i32, i32
  }
  func.func @transform_4(%arg0: i32) -> (i32, i32, i32) {
    %c0_i32 = arith.constant 0 : i32
    %c0_i32_0 = arith.constant 0 : i32
    %c0_i32_1 = arith.constant 0 : i32
    return %arg0, %c0_i32, %c0_i32_0 : i32, i32, i32
  }
}

</mosaic_0001>

<llo_original>
// kernel: tpu_custom_call.1
$region0: #{tpu_custom_call.1}
  #allocation0 [shape = 'u32[]', space=smem, size = 0x4, offset = 0x4, fixed_abs, tag = 'smem constant byte address 0x4 - core index']
  #allocation1 [shape = 'u32[144,128]{1,0:T(1,128)}', space=vmem, size = 0x12000, scoped, tag = 'internal scratch']
  #allocation2 [shape = 'f32[18,18,4]{2,1,0:T(8,128)}', space=vmem, size = 0x36000, scoped, tag = 'scratch operand']
  %s0 = inlined_call_operand.vmem [shape: f32[2,16,16,4], index: 0, kind: input, shape index: {}]
  %s1 = inlined_call_operand.vmem [shape: f32[36,8], index: 1, kind: input, shape index: {}]
  %s2 = inlined_call_operand.vmem [shape: f32[2,256,8], index: 2, kind: output, shape index: {0}]
  %s3 = inlined_call_operand.hbm [shape: f32[2,1,8], index: 3, kind: output, shape index: {1}]
  %s4 = inlined_call_operand.hbm [shape: f32[2,1,8], index: 4, kind: output, shape index: {2}]
  %5 = xla_tuple %s2, %s3, %s4
  %s6 = sld [smem:[#allocation0]]
  $region57: #{tpu_custom_call.1} parent=0
    _
  %s8 = ssub.s32 1, %s6
  %s9 = scalar_select 0, %s8, %s6
  $region1: #{tpu_custom_call.1} parent=0
    #allocation3 [shape = 'u8[1024]{0}', space=vmem, size = 0x400, scoped, tag = 'output window, operand 1']
    #allocation4 [shape = 's32[2]{0}', space=sflag, size = 0x8, scoped, tag = 'scoped memory for tpu_custom_call.1']
    #allocation5 [shape = 'u8[1024]{0}', space=vmem, size = 0x400, scoped, tag = 'output window, operand 2']
    #allocation6 [shape = 's32[2]{0}', space=sflag, size = 0x8, scoped, tag = 'scoped memory for tpu_custom_call.1']
    %10 = vsyncpa [#allocation4], 0
    %s11 = scalar_lea.sflag [#allocation4], 1
    %12 = vsyncpa %s11, 0
    %13 = vsyncpa [#allocation6], 0
    %s14 = scalar_lea.sflag [#allocation6], 1
    %15 = vsyncpa %s14, 0
    loop: start=0, step=1, limit=4
    $region2: #{tpu_custom_call.1} parent=1 // loop_pre_header
      _
    $region3: #{tpu_custom_call.1} parent=1 // loop_header
      %s17 = sphi 0, %s21
      %p18 = scmp.ge.s32.totalorder %s17, 4
      %s27 = sphi 0, %s29
      %s30 = sphi 0, %s27
      %s31 = sphi 0, %s30
      %s47 = sphi 0, %s31
      %s51 = sphi 0, %s51
      %s53 = sphi 0, %s51
      %s54 = sphi 0, %s53
      %s68 = sphi 0, %s54
      %s74 = sphi 0, %s76
      %s77 = sphi 0, %s74
      %s78 = sphi 0, %s77
      %s94 = sphi 0, %s78
      %s100 = sphi 0, %s102
      %s103 = sphi 0, %s100
      %s104 = sphi 0, %s103
      %s120 = sphi 0, %s104
      %s126 = sphi 0, %s128
      %s129 = sphi 0, %s126
      %s130 = sphi 0, %s129
      %s146 = sphi 0, %s130
    $region4: #{tpu_custom_call.1} parent=1 // loop_header_branch
      %20 = sbr.rel (%p18) target = $region8
    $region5: #{tpu_custom_call.1} parent=1 // loop_body
      %s22 = ssub.s32 %s17, 1
      %s23 = ssub.s32 %s17, 2
      %s24 = sadd.s32 %s17, 1
      %s25 = ssub.s32 %s17, %s24
      %p26 = scmp.eq.s32.totalorder %s25, 0
      %s28 = sadd.s32 %s27, 1
      %s29 = scalar_select %p26, %s27, %s28
      %p32 = pneg %p26
      %p33 = scmp.eq.s32.totalorder %s17, 1
      %p34 = por %p32, %p33
      %p35 = scmp.ne.s32.totalorder %s27, %s30
      %p36 = scmp.eq.s32.totalorder %s17, 0
      %p37 = por %p35, %p36
      %p38 = scmp.ne.s32.totalorder %s27, %s30
      %p39 = scmp.eq.s32.totalorder %s22, 1
      %p40 = por %p38, %p39
      %p41 = scmp.ne.s32.totalorder %s30, %s31
      %p42 = scmp.eq.s32.totalorder %s22, 0
      %p43 = por %p41, %p42
      %p44 = scmp.ne.s32.totalorder %s30, %s31
      %p45 = scmp.eq.s32.totalorder %s23, 1
      %p46 = por %p44, %p45
      %p48 = scmp.ne.s32.totalorder %s31, %s47
      %p49 = scmp.eq.s32.totalorder %s23, 0
      %p50 = por %p48, %p49
      %s52 = sadd.s32 %s51, 1
      %p55 = scmp.eq.s32.totalorder %s17, 1
      %p56 = scmp.ne.s32.totalorder %s51, %s53
      %p57 = scmp.eq.s32.totalorder %s17, 0
      %p58 = por %p56, %p57
      %p59 = scmp.ne.s32.totalorder %s51, %s53
      %p60 = scmp.eq.s32.totalorder %s22, 1
      %p61 = por %p59, %p60
      %p62 = scmp.ne.s32.totalorder %s53, %s54
      %p63 = scmp.eq.s32.totalorder %s22, 0
      %p64 = por %p62, %p63
      %p65 = scmp.ne.s32.totalorder %s53, %s54
      %p66 = scmp.eq.s32.totalorder %s23, 1
      %p67 = por %p65, %p66
      %p69 = scmp.ne.s32.totalorder %s54, %s68
      %p70 = scmp.eq.s32.totalorder %s23, 0
      %p71 = por %p69, %p70
      %s72 = ssub.s32 %s17, %s24
      %p73 = scmp.eq.s32.totalorder %s72, 0
      %s75 = sadd.s32 %s74, 1
      %s76 = scalar_select %p73, %s74, %s75
      %p79 = pneg %p73
      %p80 = scmp.eq.s32.totalorder %s17, 1
      %p81 = por %p79, %p80
      %p82 = scmp.ne.s32.totalorder %s74, %s77
      %p83 = scmp.eq.s32.totalorder %s17, 0
      %p84 = por %p82, %p83
      %p85 = scmp.ne.s32.totalorder %s74, %s77
      %p86 = scmp.eq.s32.totalorder %s22, 1
      %p87 = por %p85, %p86
      %p88 = scmp.ne.s32.totalorder %s77, %s78
      %p89 = scmp.eq.s32.totalorder %s22, 0
      %p90 = por %p88, %p89
      %p91 = scmp.ne.s32.totalorder %s77, %s78
      %p92 = scmp.eq.s32.totalorder %s23, 1
      %p93 = por %p91, %p92
      %p95 = scmp.ne.s32.totalorder %s78, %s94
      %p96 = scmp.eq.s32.totalorder %s23, 0
      %p97 = por %p95, %p96
      %s98 = ssub.s32 %s17, %s24
      %p99 = scmp.eq.s32.totalorder %s98, 0
      %s101 = sadd.s32 %s100, 1
      %s102 = scalar_select %p99, %s100, %s101
      %p105 = pneg %p99
      %p106 = scmp.eq.s32.totalorder %s17, 1
      %p107 = por %p105, %p106
      %p108 = scmp.ne.s32.totalorder %s100, %s103
      %p109 = scmp.eq.s32.totalorder %s17, 0
      %p110 = por %p108, %p109
      %p111 = scmp.ne.s32.totalorder %s100, %s103
      %p112 = scmp.eq.s32.totalorder %s22, 1
      %p113 = por %p111, %p112
      %p114 = scmp.ne.s32.totalorder %s103, %s104
      %p115 = scmp.eq.s32.totalorder %s22, 0
      %p116 = por %p114, %p115
      %p117 = scmp.ne.s32.totalorder %s103, %s104
      %p118 = scmp.eq.s32.totalorder %s23, 1
      %p119 = por %p117, %p118
      %p121 = scmp.ne.s32.totalorder %s104, %s120
      %p122 = scmp.eq.s32.totalorder %s23, 0
      %p123 = por %p121, %p122
      %s124 = ssub.s32 %s17, %s24
      %p125 = scmp.eq.s32.totalorder %s124, 0
      %s127 = sadd.s32 %s126, 1
      %s128 = scalar_select %p125, %s126, %s127
      %p131 = pneg %p125
      %p132 = scmp.eq.s32.totalorder %s17, 1
      %p133 = por %p131, %p132
      %p134 = scmp.ne.s32.totalorder %s126, %s129
      %p135 = scmp.eq.s32.totalorder %s17, 0
      %p136 = por %p134, %p135
      %p137 = scmp.ne.s32.totalorder %s126, %s129
      %p138 = scmp.eq.s32.totalorder %s22, 1
      %p139 = por %p137, %p138
      %p140 = scmp.ne.s32.totalorder %s129, %s130
      %p141 = scmp.eq.s32.totalorder %s22, 0
      %p142 = por %p140, %p141
      %p143 = scmp.ne.s32.totalorder %s129, %s130
      %p144 = scmp.eq.s32.totalorder %s23, 1
      %p145 = por %p143, %p144
      %p147 = scmp.ne.s32.totalorder %s130, %s146
      %p148 = scmp.eq.s32.totalorder %s23, 0
      %p149 = por %p147, %p148
      %p150 = scmp.le.s32.totalorder 1, %s17
      %p151 = scmp.lt.s32.totalorder %s17, 3
      %p152 = pnand %p150, %p151
      %p153 = pneg %p152
      // Predicated region
      $region9: #{tpu_custom_call.1} parent=5 // pred_check
        _
      $region10: #{tpu_custom_call.1} parent=5 // pred_check_branch
        %155 = sbr.rel (%p152) target = $region12
      $region11: #{tpu_custom_call.1} parent=5 // pred_region
        %s156 = ssub.s32 %s17, 1
        // Predicated region
        $region13: #{tpu_custom_call.1} parent=11 // pred_check
          %p157 = pneg %p64
        $region14: #{tpu_custom_call.1} parent=11 // pred_check_branch
          %159 = sbr.rel (%p157) target = $region16
        $region15: #{tpu_custom_call.1} parent=11 // pred_region
          _
        $region16: #{tpu_custom_call.1} parent=11 // pred_fallthru
          _
      $region12: #{tpu_custom_call.1} parent=5 // pred_fallthru
        _
      %p160 = scmp.lt.s32.totalorder %s17, 2
      // Predicated region
      $region17: #{tpu_custom_call.1} parent=5 // pred_check
        %p161 = pneg %p160
      $region18: #{tpu_custom_call.1} parent=5 // pred_check_branch
        %163 = sbr.rel (%p161) target = $region20
      $region19: #{tpu_custom_call.1} parent=5 // pred_region
        // Predicated region
        $region21: #{tpu_custom_call.1} parent=19 // pred_check
          %p164 = pneg %p37
        $region22: #{tpu_custom_call.1} parent=19 // pred_check_branch
          %166 = sbr.rel (%p164) target = $region24
        $region23: #{tpu_custom_call.1} parent=19 // pred_region
          %p167 = scmp.lt.s32.totalorder %s17, 1
          %s168 = scalar_select %p167, %s17, 1
          %s169 = smul.addr %s168, 32
          %s170 = smul.addr %s169, 8
          %s171 = scalar_lea.vmem %s0, %s170
        $region24: #{tpu_custom_call.1} parent=19 // pred_fallthru
          _
      $region20: #{tpu_custom_call.1} parent=5 // pred_fallthru
        _
      %p172 = scmp.le.s32.totalorder 1, %s17
      %p173 = scmp.lt.s32.totalorder %s17, 3
      %p174 = pnand %p172, %p173
      %p175 = pneg %p174
      // Predicated region
      $region25: #{tpu_custom_call.1} parent=5 // pred_check
        _
      $region26: #{tpu_custom_call.1} parent=5 // pred_check_branch
        %177 = sbr.rel (%p174) target = $region28
      $region27: #{tpu_custom_call.1} parent=5 // pred_region
        %s178 = ssub.s32 %s17, 1
        %p179 = scmp.lt.s32.totalorder %s22, 1
        %s180 = scalar_select %p179, %s22, 1
        %s181 = smul.addr %s180, 32
        %s182 = smul.addr %s181, 8
        %s183 = scalar_lea.vmem %s0, %s182
        %p184 = pneg %p43
        %p185 = pneg %p40
        %p186 = pneg %p64
        %p187 = pneg %p61
        %p188 = pneg %p90
        %p189 = pneg %p87
        %p190 = scmp.lt.s32.totalorder %s22, 1
        %s191 = scalar_select %p190, %s22, 1
        %s192 = smul.addr %s191, 32
        %s193 = smul.addr %s192, 8
        %s194 = scalar_lea.vmem %s2, %s193
        %p195 = pneg %p116
        %p196 = pneg %p113
        %s197 = sand.u32 %s103, 1
        %s198 = scalar_lea.sflag [#allocation4], %s197
        %s199 = sand.u32 %s103, 1
        %s200 = scalar_lea.vmem [#allocation3], %s199
        %p201 = pneg %p142
        %p202 = pneg %p139
        %s203 = sand.u32 %s129, 1
        %s204 = scalar_lea.sflag [#allocation6], %s203
        %s205 = sand.u32 %s129, 1
        %s206 = scalar_lea.vmem [#allocation5], %s205
        %p207 = scmp.lt.s32.totalorder %s22, 1
        %s208 = scalar_select %p207, %s22, 1
        %s209 = smul.addr %s208, 32
        %s210 = smul.addr %s209, 8
        %s211 = scalar_lea.vmem %s0, %s210
        %p212 = scmp.lt.s32.totalorder %s22, 1
        %s213 = scalar_select %p212, %s22, 1
        %s214 = smul.addr %s213, 32
        %s215 = smul.addr %s214, 8
        %s216 = scalar_lea.vmem %s2, %s215
        %vm217 = vcmask 31744
        %218 = vst.msk [vmem:[#allocation2] sm:$0xff] %vm217, 0.0
        %219 = vst.msk [vmem:[#allocation2 + $0x8] sm:$0xff] %vm217, 0.0
        %vm220 = vcmask 25600
        %221 = vst.msk [vmem:[#allocation2 + $0x10] sm:$0x3] %vm220, 0.0
        %222 = vst.msk [vmem:[#allocation2 + $0x18] sm:$0xff] %vm217, 0.0
        %223 = vst.msk [vmem:[#allocation2 + $0x20] sm:$0xff] %vm217, 0.0
        %224 = vst.msk [vmem:[#allocation2 + $0x28] sm:$0x3] %vm220, 0.0
        %225 = vst.msk [vmem:[#allocation2 + $0x30] sm:$0xff] %vm217, 0.0
        %226 = vst.msk [vmem:[#allocation2 + $0x38] sm:$0xff] %vm217, 0.0
        %227 = vst.msk [vmem:[#allocation2 + $0x40] sm:$0x3] %vm220, 0.0
        %228 = vst.msk [vmem:[#allocation2 + $0x48] sm:$0xff] %vm217, 0.0
        %229 = vst.msk [vmem:[#allocation2 + $0x50] sm:$0xff] %vm217, 0.0
        %230 = vst.msk [vmem:[#allocation2 + $0x58] sm:$0x3] %vm220, 0.0
        %231 = vst.msk [vmem:[#allocation2 + $0x60] sm:$0xff] %vm217, 0.0
        %232 = vst.msk [vmem:[#allocation2 + $0x68] sm:$0xff] %vm217, 0.0
        %233 = vst.msk [vmem:[#allocation2 + $0x70] sm:$0x3] %vm220, 0.0
        %234 = vst.msk [vmem:[#allocation2 + $0x78] sm:$0xff] %vm217, 0.0
        %235 = vst.msk [vmem:[#allocation2 + $0x80] sm:$0xff] %vm217, 0.0
        %236 = vst.msk [vmem:[#allocation2 + $0x88] sm:$0x3] %vm220, 0.0
        %237 = vst.msk [vmem:[#allocation2 + $0x90] sm:$0xff] %vm217, 0.0
        %238 = vst.msk [vmem:[#allocation2 + $0x98] sm:$0xff] %vm217, 0.0
        %239 = vst.msk [vmem:[#allocation2 + $0xa0] sm:$0x3] %vm220, 0.0
        %240 = vst.msk [vmem:[#allocation2 + $0xa8] sm:$0xff] %vm217, 0.0
        %241 = vst.msk [vmem:[#allocation2 + $0xb0] sm:$0xff] %vm217, 0.0
        %242 = vst.msk [vmem:[#allocation2 + $0xb8] sm:$0x3] %vm220, 0.0
        %243 = vst.msk [vmem:[#allocation2 + $0xc0] sm:$0xff] %vm217, 0.0
        %244 = vst.msk [vmem:[#allocation2 + $0xc8] sm:$0xff] %vm217, 0.0
        %245 = vst.msk [vmem:[#allocation2 + $0xd0] sm:$0x3] %vm220, 0.0
        %246 = vst.msk [vmem:[#allocation2 + $0xd8] sm:$0xff] %vm217, 0.0
        %247 = vst.msk [vmem:[#allocation2 + $0xe0] sm:$0xff] %vm217, 0.0
        %248 = vst.msk [vmem:[#allocation2 + $0xe8] sm:$0x3] %vm220, 0.0
        %249 = vst.msk [vmem:[#allocation2 + $0xf0] sm:$0xff] %vm217, 0.0
        %250 = vst.msk [vmem:[#allocation2 + $0xf8] sm:$0xff] %vm217, 0.0
        %251 = vst.msk [vmem:[#allocation2 + $0x100] sm:$0x3] %vm220, 0.0
        %252 = vst.msk [vmem:[#allocation2 + $0x108] sm:$0xff] %vm217, 0.0
        %253 = vst.msk [vmem:[#allocation2 + $0x110] sm:$0xff] %vm217, 0.0
        %254 = vst.msk [vmem:[#allocation2 + $0x118] sm:$0x3] %vm220, 0.0
        %255 = vst.msk [vmem:[#allocation2 + $0x120] sm:$0xff] %vm217, 0.0
        %256 = vst.msk [vmem:[#allocation2 + $0x128] sm:$0xff] %vm217, 0.0
        %257 = vst.msk [vmem:[#allocation2 + $0x130] sm:$0x3] %vm220, 0.0
        %258 = vst.msk [vmem:[#allocation2 + $0x138] sm:$0xff] %vm217, 0.0
        %259 = vst.msk [vmem:[#allocation2 + $0x140] sm:$0xff] %vm217, 0.0
        %260 = vst.msk [vmem:[#allocation2 + $0x148] sm:$0x3] %vm220, 0.0
        %261 = vst.msk [vmem:[#allocation2 + $0x150] sm:$0xff] %vm217, 0.0
        %262 = vst.msk [vmem:[#allocation2 + $0x158] sm:$0xff] %vm217, 0.0
        %263 = vst.msk [vmem:[#allocation2 + $0x160] sm:$0x3] %vm220, 0.0
        %264 = vst.msk [vmem:[#allocation2 + $0x168] sm:$0xff] %vm217, 0.0
        %265 = vst.msk [vmem:[#allocation2 + $0x170] sm:$0xff] %vm217, 0.0
        %266 = vst.msk [vmem:[#allocation2 + $0x178] sm:$0x3] %vm220, 0.0
        %267 = vst.msk [vmem:[#allocation2 + $0x180] sm:$0xff] %vm217, 0.0
        %268 = vst.msk [vmem:[#allocation2 + $0x188] sm:$0xff] %vm217, 0.0
        %269 = vst.msk [vmem:[#allocation2 + $0x190] sm:$0x3] %vm220, 0.0
        %270 = vst.msk [vmem:[#allocation2 + $0x198] sm:$0xff] %vm217, 0.0
        %271 = vst.msk [vmem:[#allocation2 + $0x1a0] sm:$0xff] %vm217, 0.0
        %272 = vst.msk [vmem:[#allocation2 + $0x1a8] sm:$0x3] %vm220, 0.0
        %v273 = vld [vmem:[%s211] sm:$0xff]
        %v274 = vld [vmem:[%s211 + $0x8] sm:$0xff]
        %v275 = vld [vmem:[%s211 + $0x10] sm:$0xff]
        %v276 = vld [vmem:[%s211 + $0x18] sm:$0xff]
        %v277 = vld [vmem:[%s211 + $0x20] sm:$0xff]
        %v278 = vld [vmem:[%s211 + $0x28] sm:$0xff]
        %v279 = vld [vmem:[%s211 + $0x30] sm:$0xff]
        %v280 = vld [vmem:[%s211 + $0x38] sm:$0xff]
        %v281 = vld [vmem:[%s211 + $0x40] sm:$0xff]
        %v282 = vld [vmem:[%s211 + $0x48] sm:$0xff]
        %v283 = vld [vmem:[%s211 + $0x50] sm:$0xff]
        %v284 = vld [vmem:[%s211 + $0x58] sm:$0xff]
        %v285 = vld [vmem:[%s211 + $0x60] sm:$0xff]
        %v286 = vld [vmem:[%s211 + $0x68] sm:$0xff]
        %v287 = vld [vmem:[%s211 + $0x70] sm:$0xff]
        %v288 = vld [vmem:[%s211 + $0x78] sm:$0xff]
        %v289 = vld [vmem:[%s211 + $0x80] sm:$0xff]
        %v290 = vld [vmem:[%s211 + $0x88] sm:$0xff]
        %v291 = vld [vmem:[%s211 + $0x90] sm:$0xff]
        %v292 = vld [vmem:[%s211 + $0x98] sm:$0xff]
        %v293 = vld [vmem:[%s211 + $0xa0] sm:$0xff]
        %v294 = vld [vmem:[%s211 + $0xa8] sm:$0xff]
        %v295 = vld [vmem:[%s211 + $0xb0] sm:$0xff]
        %v296 = vld [vmem:[%s211 + $0xb8] sm:$0xff]
        %v297 = vld [vmem:[%s211 + $0xc0] sm:$0xff]
        %v298 = vld [vmem:[%s211 + $0xc8] sm:$0xff]
        %v299 = vld [vmem:[%s211 + $0xd0] sm:$0xff]
        %v300 = vld [vmem:[%s211 + $0xd8] sm:$0xff]
        %v301 = vld [vmem:[%s211 + $0xe0] sm:$0xff]
        %v302 = vld [vmem:[%s211 + $0xe8] sm:$0xff]
        %v303 = vld [vmem:[%s211 + $0xf0] sm:$0xff]
        %v304 = vld [vmem:[%s211 + $0xf8] sm:$0xff]
        %s305 = scalar_lea.vmem [#allocation2], 24
        %306 = vst.msk [vmem:[%s305 + $0x1] sm:$0xff] %vm217, %v273
        %307 = vst.msk [vmem:[%s305 + $0x9] sm:$0xff] %vm217, %v274
        %308 = vst.msk [vmem:[%s305 + $0x19] sm:$0xff] %vm217, %v275
        %309 = vst.msk [vmem:[%s305 + $0x21] sm:$0xff] %vm217, %v276
        %310 = vst.msk [vmem:[%s305 + $0x31] sm:$0xff] %vm217, %v277
        %311 = vst.msk [vmem:[%s305 + $0x39] sm:$0xff] %vm217, %v278
        %312 = vst.msk [vmem:[%s305 + $0x49] sm:$0xff] %vm217, %v279
        %313 = vst.msk [vmem:[%s305 + $0x51] sm:$0xff] %vm217, %v280
        %314 = vst.msk [vmem:[%s305 + $0x61] sm:$0xff] %vm217, %v281
        %315 = vst.msk [vmem:[%s305 + $0x69] sm:$0xff] %vm217, %v282
        %316 = vst.msk [vmem:[%s305 + $0x79] sm:$0xff] %vm217, %v283
        %317 = vst.msk [vmem:[%s305 + $0x81] sm:$0xff] %vm217, %v284
        %318 = vst.msk [vmem:[%s305 + $0x91] sm:$0xff] %vm217, %v285
        %319 = vst.msk [vmem:[%s305 + $0x99] sm:$0xff] %vm217, %v286
        %320 = vst.msk [vmem:[%s305 + $0xa9] sm:$0xff] %vm217, %v287
        %321 = vst.msk [vmem:[%s305 + $0xb1] sm:$0xff] %vm217, %v288
        %322 = vst.msk [vmem:[%s305 + $0xc1] sm:$0xff] %vm217, %v289
        %323 = vst.msk [vmem:[%s305 + $0xc9] sm:$0xff] %vm217, %v290
        %324 = vst.msk [vmem:[%s305 + $0xd9] sm:$0xff] %vm217, %v291
        %325 = vst.msk [vmem:[%s305 + $0xe1] sm:$0xff] %vm217, %v292
        %326 = vst.msk [vmem:[%s305 + $0xf1] sm:$0xff] %vm217, %v293
        %327 = vst.msk [vmem:[%s305 + $0xf9] sm:$0xff] %vm217, %v294
        %328 = vst.msk [vmem:[%s305 + $0x109] sm:$0xff] %vm217, %v295
        %329 = vst.msk [vmem:[%s305 + $0x111] sm:$0xff] %vm217, %v296
        %330 = vst.msk [vmem:[%s305 + $0x121] sm:$0xff] %vm217, %v297
        %331 = vst.msk [vmem:[%s305 + $0x129] sm:$0xff] %vm217, %v298
        %332 = vst.msk [vmem:[%s305 + $0x139] sm:$0xff] %vm217, %v299
        %333 = vst.msk [vmem:[%s305 + $0x141] sm:$0xff] %vm217, %v300
        %334 = vst.msk [vmem:[%s305 + $0x151] sm:$0xff] %vm217, %v301
        %335 = vst.msk [vmem:[%s305 + $0x159] sm:$0xff] %vm217, %v302
        %336 = vst.msk [vmem:[%s305 + $0x169] sm:$0xff] %vm217, %v303
        %337 = vst.msk [vmem:[%s305 + $0x171] sm:$0xff] %vm217, %v304
        %v338 = vld [vmem:[#allocation2] sm:$0xff]
        %v339 = vld [vmem:[#allocation2 + $0x8] sm:$0xff]
        %v340 = vld [vmem:[#allocation2 + $0x10] sm:$0x3]
        %v341 = vld [vmem:[#allocation2 + $0x18] sm:$0xff]
        %v342 = vld [vmem:[#allocation2 + $0x20] sm:$0xff]
        %v343 = vld [vmem:[#allocation2 + $0x28] sm:$0x3]
        %v344 = vld [vmem:[#allocation2 + $0x30] sm:$0xff]
        %v345 = vld [vmem:[#allocation2 + $0x38] sm:$0xff]
        %v346 = vld [vmem:[#allocation2 + $0x40] sm:$0x3]
        %v347 = vld [vmem:[#allocation2 + $0x48] sm:$0xff]
        %v348 = vld [vmem:[#allocation2 + $0x50] sm:$0xff]
        %v349 = vld [vmem:[#allocation2 + $0x58] sm:$0x3]
        %v350 = vld [vmem:[#allocation2 + $0x60] sm:$0xff]
        %v351 = vld [vmem:[#allocation2 + $0x68] sm:$0xff]
        %v352 = vld [vmem:[#allocation2 + $0x70] sm:$0x3]
        %v353 = vld [vmem:[#allocation2 + $0x78] sm:$0xff]
        %v354 = vld [vmem:[#allocation2 + $0x80] sm:$0xff]
        %v355 = vld [vmem:[#allocation2 + $0x88] sm:$0x3]
        %v356 = vld [vmem:[#allocation2 + $0x90] sm:$0xff]
        %v357 = vld [vmem:[#allocation2 + $0x98] sm:$0xff]
        %v358 = vld [vmem:[#allocation2 + $0xa0] sm:$0x3]
        %v359 = vld [vmem:[#allocation2 + $0xa8] sm:$0xff]
        %v360 = vld [vmem:[#allocation2 + $0xb0] sm:$0xff]
        %v361 = vld [vmem:[#allocation2 + $0xb8] sm:$0x3]
        %v362 = vld [vmem:[#allocation2 + $0xc0] sm:$0xff]
        %v363 = vld [vmem:[#allocation2 + $0xc8] sm:$0xff]
        %v364 = vld [vmem:[#allocation2 + $0xd0] sm:$0x3]
        %v365 = vld [vmem:[#allocation2 + $0xd8] sm:$0xff]
        %v366 = vld [vmem:[#allocation2 + $0xe0] sm:$0xff]
        %v367 = vld [vmem:[#allocation2 + $0xe8] sm:$0x3]
        %v368 = vld [vmem:[#allocation2 + $0xf0] sm:$0xff]
        %v369 = vld [vmem:[#allocation2 + $0xf8] sm:$0xff]
        %v370 = vld [vmem:[#allocation2 + $0x100] sm:$0x3]
        %v371 = vld [vmem:[#allocation2 + $0x108] sm:$0xff]
        %v372 = vld [vmem:[#allocation2 + $0x110] sm:$0xff]
        %v373 = vld [vmem:[#allocation2 + $0x118] sm:$0x3]
        %v374 = vld [vmem:[#allocation2 + $0x120] sm:$0xff]
        %v375 = vld [vmem:[#allocation2 + $0x128] sm:$0xff]
        %v376 = vld [vmem:[#allocation2 + $0x130] sm:$0x3]
        %v377 = vld [vmem:[#allocation2 + $0x138] sm:$0xff]
        %v378 = vld [vmem:[#allocation2 + $0x140] sm:$0xff]
        %v379 = vld [vmem:[#allocation2 + $0x148] sm:$0x3]
        %v380 = vld [vmem:[#allocation2 + $0x150] sm:$0xff]
        %v381 = vld [vmem:[#allocation2 + $0x158] sm:$0xff]
        %v382 = vld [vmem:[#allocation2 + $0x160] sm:$0x3]
        %v383 = vld [vmem:[#allocation2 + $0x168] sm:$0xff]
        %v384 = vld [vmem:[#allocation2 + $0x170] sm:$0xff]
        %v385 = vld [vmem:[#allocation2 + $0x178] sm:$0x3]
        %v386 = vld [vmem:[#allocation2 + $0x180] sm:$0xff]
        %v387 = vld [vmem:[#allocation2 + $0x188] sm:$0xff]
        %v388 = vld [vmem:[#allocation2 + $0x190] sm:$0x3]
        %v389 = vld [vmem:[#allocation2 + $0x198] sm:$0xff]
        %v390 = vld [vmem:[#allocation2 + $0x1a0] sm:$0xff]
        %v391 = vld [vmem:[#allocation2 + $0x1a8] sm:$0x3]
        %vm440 = vcmask 1046528
        %v441 = vrot.slane %v338, 1
        %v442 = vrot.slane %v339, 1
        %v443 = vsel %vm440, %v441, %v442
        %v444 = vrot.slane %v340, 1
        %v445 = vsel %vm440, %v442, %v444
        %v446 = vrot.slane %v341, 1
        %v447 = vrot.slane %v342, 1
        %v448 = vsel %vm440, %v446, %v447
        %v449 = vrot.slane %v343, 1
        %v450 = vsel %vm440, %v447, %v449
        %v451 = vrot.slane %v344, 1
        %v452 = vrot.slane %v345, 1
        %v453 = vsel %vm440, %v451, %v452
        %v454 = vrot.slane %v346, 1
        %v455 = vsel %vm440, %v452, %v454
        %v456 = vrot.slane %v347, 1
        %v457 = vrot.slane %v348, 1
        %v458 = vsel %vm440, %v456, %v457
        %v459 = vrot.slane %v349, 1
        %v460 = vsel %vm440, %v457, %v459
        %v461 = vrot.slane %v350, 1
        %v462 = vrot.slane %v351, 1
        %v463 = vsel %vm440, %v461, %v462
        %v464 = vrot.slane %v352, 1
        %v465 = vsel %vm440, %v462, %v464
        %v466 = vrot.slane %v353, 1
        %v467 = vrot.slane %v354, 1
        %v468 = vsel %vm440, %v466, %v467
        %v469 = vrot.slane %v355, 1
        %v470 = vsel %vm440, %v467, %v469
        %v471 = vrot.slane %v356, 1
        %v472 = vrot.slane %v357, 1
        %v473 = vsel %vm440, %v471, %v472
        %v474 = vrot.slane %v358, 1
        %v475 = vsel %vm440, %v472, %v474
        %v476 = vrot.slane %v359, 1
        %v477 = vrot.slane %v360, 1
        %v478 = vsel %vm440, %v476, %v477
        %v479 = vrot.slane %v361, 1
        %v480 = vsel %vm440, %v477, %v479
        %v481 = vrot.slane %v362, 1
        %v482 = vrot.slane %v363, 1
        %v483 = vsel %vm440, %v481, %v482
        %v484 = vrot.slane %v364, 1
        %v485 = vsel %vm440, %v482, %v484
        %v486 = vrot.slane %v365, 1
        %v487 = vrot.slane %v366, 1
        %v488 = vsel %vm440, %v486, %v487
        %v489 = vrot.slane %v367, 1
        %v490 = vsel %vm440, %v487, %v489
        %v491 = vrot.slane %v368, 1
        %v492 = vrot.slane %v369, 1
        %v493 = vsel %vm440, %v491, %v492
        %v494 = vrot.slane %v370, 1
        %v495 = vsel %vm440, %v492, %v494
        %v496 = vrot.slane %v371, 1
        %v497 = vrot.slane %v372, 1
        %v498 = vsel %vm440, %v496, %v497
        %v499 = vrot.slane %v373, 1
        %v500 = vsel %vm440, %v497, %v499
        %v501 = vrot.slane %v374, 1
        %v502 = vrot.slane %v375, 1
        %v503 = vsel %vm440, %v501, %v502
        %v504 = vrot.slane %v376, 1
        %v505 = vsel %vm440, %v502, %v504
        %v506 = vrot.slane %v377, 1
        %v507 = vrot.slane %v378, 1
        %v508 = vsel %vm440, %v506, %v507
        %v509 = vrot.slane %v379, 1
        %v510 = vsel %vm440, %v507, %v509
        %v511 = vrot.slane %v380, 1
        %v512 = vrot.slane %v381, 1
        %v513 = vsel %vm440, %v511, %v512
        %v514 = vrot.slane %v382, 1
        %v515 = vsel %vm440, %v512, %v514
        %v516 = vrot.slane %v383, 1
        %v517 = vrot.slane %v384, 1
        %v518 = vsel %vm440, %v516, %v517
        %v519 = vrot.slane %v385, 1
        %v520 = vsel %vm440, %v517, %v519
        %vm521 = vcmask 1045504
        %v522 = vrot.slane %v338, 2
        %v523 = vrot.slane %v339, 2
        %v524 = vsel %vm521, %v522, %v523
        %v525 = vrot.slane %v340, 2
        %v526 = vsel %vm521, %v523, %v525
        %v527 = vrot.slane %v341, 2
        %v528 = vrot.slane %v342, 2
        %v529 = vsel %vm521, %v527, %v528
        %v530 = vrot.slane %v343, 2
        %v531 = vsel %vm521, %v528, %v530
        %v532 = vrot.slane %v344, 2
        %v533 = vrot.slane %v345, 2
        %v534 = vsel %vm521, %v532, %v533
        %v535 = vrot.slane %v346, 2
        %v536 = vsel %vm521, %v533, %v535
        %v537 = vrot.slane %v347, 2
        %v538 = vrot.slane %v348, 2
        %v539 = vsel %vm521, %v537, %v538
        %v540 = vrot.slane %v349, 2
        %v541 = vsel %vm521, %v538, %v540
        %v542 = vrot.slane %v350, 2
        %v543 = vrot.slane %v351, 2
        %v544 = vsel %vm521, %v542, %v543
        %v545 = vrot.slane %v352, 2
        %v546 = vsel %vm521, %v543, %v545
        %v547 = vrot.slane %v353, 2
        %v548 = vrot.slane %v354, 2
        %v549 = vsel %vm521, %v547, %v548
        %v550 = vrot.slane %v355, 2
        %v551 = vsel %vm521, %v548, %v550
        %v552 = vrot.slane %v356, 2
        %v553 = vrot.slane %v357, 2
        %v554 = vsel %vm521, %v552, %v553
        %v555 = vrot.slane %v358, 2
        %v556 = vsel %vm521, %v553, %v555
        %v557 = vrot.slane %v359, 2
        %v558 = vrot.slane %v360, 2
        %v559 = vsel %vm521, %v557, %v558
        %v560 = vrot.slane %v361, 2
        %v561 = vsel %vm521, %v558, %v560
        %v562 = vrot.slane %v362, 2
        %v563 = vrot.slane %v363, 2
        %v564 = vsel %vm521, %v562, %v563
        %v565 = vrot.slane %v364, 2
        %v566 = vsel %vm521, %v563, %v565
        %v567 = vrot.slane %v365, 2
        %v568 = vrot.slane %v366, 2
        %v569 = vsel %vm521, %v567, %v568
        %v570 = vrot.slane %v367, 2
        %v571 = vsel %vm521, %v568, %v570
        %v572 = vrot.slane %v368, 2
        %v573 = vrot.slane %v369, 2
        %v574 = vsel %vm521, %v572, %v573
        %v575 = vrot.slane %v370, 2
        %v576 = vsel %vm521, %v573, %v575
        %v577 = vrot.slane %v371, 2
        %v578 = vrot.slane %v372, 2
        %v579 = vsel %vm521, %v577, %v578
        %v580 = vrot.slane %v373, 2
        %v581 = vsel %vm521, %v578, %v580
        %v582 = vrot.slane %v374, 2
        %v583 = vrot.slane %v375, 2
        %v584 = vsel %vm521, %v582, %v583
        %v585 = vrot.slane %v376, 2
        %v586 = vsel %vm521, %v583, %v585
        %v587 = vrot.slane %v377, 2
        %v588 = vrot.slane %v378, 2
        %v589 = vsel %vm521, %v587, %v588
        %v590 = vrot.slane %v379, 2
        %v591 = vsel %vm521, %v588, %v590
        %v592 = vrot.slane %v380, 2
        %v593 = vrot.slane %v381, 2
        %v594 = vsel %vm521, %v592, %v593
        %v595 = vrot.slane %v382, 2
        %v596 = vsel %vm521, %v593, %v595
        %v597 = vrot.slane %v383, 2
        %v598 = vrot.slane %v384, 2
        %v599 = vsel %vm521, %v597, %v598
        %v600 = vrot.slane %v385, 2
        %v601 = vsel %vm521, %v598, %v600
        %v605 = vrot.slane %v386, 1
        %v606 = vrot.slane %v387, 1
        %v607 = vsel %vm440, %v605, %v606
        %v608 = vrot.slane %v388, 1
        %v609 = vsel %vm440, %v606, %v608
        %v610 = vrot.slane %v386, 2
        %v611 = vrot.slane %v387, 2
        %v612 = vsel %vm521, %v610, %v611
        %v613 = vrot.slane %v388, 2
        %v614 = vsel %vm521, %v611, %v613
        %v618 = vrot.slane %v389, 1
        %v619 = vrot.slane %v390, 1
        %v620 = vsel %vm440, %v618, %v619
        %v621 = vrot.slane %v391, 1
        %v622 = vsel %vm440, %v619, %v621
        %v623 = vrot.slane %v389, 2
        %v624 = vrot.slane %v390, 2
        %v625 = vsel %vm521, %v623, %v624
        %v626 = vrot.slane %v391, 2
        %v627 = vsel %vm521, %v624, %v626
        %628 = vrot.lane.b32.xlu0 %v443, 4
        %v629 = vpop.permute.xlu0 %628
        %630 = vrot.lane.b32.xlu0 %v445, 4
        %v631 = vpop.permute.xlu0 %630
        %632 = vrot.lane.b32.xlu0 %v448, 4
        %v633 = vpop.permute.xlu0 %632
        %634 = vrot.lane.b32.xlu0 %v450, 4
        %v635 = vpop.permute.xlu0 %634
        %636 = vrot.lane.b32.xlu0 %v453, 4
        %v637 = vpop.permute.xlu0 %636
        %638 = vrot.lane.b32.xlu0 %v455, 4
        %v639 = vpop.permute.xlu0 %638
        %640 = vrot.lane.b32.xlu0 %v458, 4
        %v641 = vpop.permute.xlu0 %640
        %642 = vrot.lane.b32.xlu0 %v460, 4
        %v643 = vpop.permute.xlu0 %642
        %644 = vrot.lane.b32.xlu0 %v463, 4
        %v645 = vpop.permute.xlu0 %644
        %646 = vrot.lane.b32.xlu0 %v465, 4
        %v647 = vpop.permute.xlu0 %646
        %648 = vrot.lane.b32.xlu0 %v468, 4
        %v649 = vpop.permute.xlu0 %648
        %650 = vrot.lane.b32.xlu0 %v470, 4
        %v651 = vpop.permute.xlu0 %650
        %652 = vrot.lane.b32.xlu0 %v473, 4
        %v653 = vpop.permute.xlu0 %652
        %654 = vrot.lane.b32.xlu0 %v475, 4
        %v655 = vpop.permute.xlu0 %654
        %656 = vrot.lane.b32.xlu0 %v478, 4
        %v657 = vpop.permute.xlu0 %656
        %658 = vrot.lane.b32.xlu0 %v480, 4
        %v659 = vpop.permute.xlu0 %658
        %660 = vrot.lane.b32.xlu0 %v483, 4
        %v661 = vpop.permute.xlu0 %660
        %662 = vrot.lane.b32.xlu0 %v485, 4
        %v663 = vpop.permute.xlu0 %662
        %664 = vrot.lane.b32.xlu0 %v488, 4
        %v665 = vpop.permute.xlu0 %664
        %666 = vrot.lane.b32.xlu0 %v490, 4
        %v667 = vpop.permute.xlu0 %666
        %668 = vrot.lane.b32.xlu0 %v493, 4
        %v669 = vpop.permute.xlu0 %668
        %670 = vrot.lane.b32.xlu0 %v495, 4
        %v671 = vpop.permute.xlu0 %670
        %672 = vrot.lane.b32.xlu0 %v498, 4
        %v673 = vpop.permute.xlu0 %672
        %674 = vrot.lane.b32.xlu0 %v500, 4
        %v675 = vpop.permute.xlu0 %674
        %676 = vrot.lane.b32.xlu0 %v503, 4
        %v677 = vpop.permute.xlu0 %676
        %678 = vrot.lane.b32.xlu0 %v505, 4
        %v679 = vpop.permute.xlu0 %678
        %680 = vrot.lane.b32.xlu0 %v508, 4
        %v681 = vpop.permute.xlu0 %680
        %682 = vrot.lane.b32.xlu0 %v510, 4
        %v683 = vpop.permute.xlu0 %682
        %684 = vrot.lane.b32.xlu0 %v513, 4
        %v685 = vpop.permute.xlu0 %684
        %686 = vrot.lane.b32.xlu0 %v515, 4
        %v687 = vpop.permute.xlu0 %686
        %688 = vrot.lane.b32.xlu0 %v518, 4
        %v689 = vpop.permute.xlu0 %688
        %690 = vrot.lane.b32.xlu0 %v520, 4
        %v691 = vpop.permute.xlu0 %690
        %724 = vrot.lane.b32.xlu0 %v524, 8
        %v725 = vpop.permute.xlu0 %724
        %726 = vrot.lane.b32.xlu0 %v526, 8
        %v727 = vpop.permute.xlu0 %726
        %728 = vrot.lane.b32.xlu0 %v529, 8
        %v729 = vpop.permute.xlu0 %728
        %730 = vrot.lane.b32.xlu0 %v531, 8
        %v731 = vpop.permute.xlu0 %730
        %732 = vrot.lane.b32.xlu0 %v534, 8
        %v733 = vpop.permute.xlu0 %732
        %734 = vrot.lane.b32.xlu0 %v536, 8
        %v735 = vpop.permute.xlu0 %734
        %736 = vrot.lane.b32.xlu0 %v539, 8
        %v737 = vpop.permute.xlu0 %736
        %738 = vrot.lane.b32.xlu0 %v541, 8
        %v739 = vpop.permute.xlu0 %738
        %740 = vrot.lane.b32.xlu0 %v544, 8
        %v741 = vpop.permute.xlu0 %740
        %742 = vrot.lane.b32.xlu0 %v546, 8
        %v743 = vpop.permute.xlu0 %742
        %744 = vrot.lane.b32.xlu0 %v549, 8
        %v745 = vpop.permute.xlu0 %744
        %746 = vrot.lane.b32.xlu0 %v551, 8
        %v747 = vpop.permute.xlu0 %746
        %748 = vrot.lane.b32.xlu0 %v554, 8
        %v749 = vpop.permute.xlu0 %748
        %750 = vrot.lane.b32.xlu0 %v556, 8
        %v751 = vpop.permute.xlu0 %750
        %752 = vrot.lane.b32.xlu0 %v559, 8
        %v753 = vpop.permute.xlu0 %752
        %754 = vrot.lane.b32.xlu0 %v561, 8
        %v755 = vpop.permute.xlu0 %754
        %756 = vrot.lane.b32.xlu0 %v564, 8
        %v757 = vpop.permute.xlu0 %756
        %758 = vrot.lane.b32.xlu0 %v566, 8
        %v759 = vpop.permute.xlu0 %758
        %760 = vrot.lane.b32.xlu0 %v569, 8
        %v761 = vpop.permute.xlu0 %760
        %762 = vrot.lane.b32.xlu0 %v571, 8
        %v763 = vpop.permute.xlu0 %762
        %764 = vrot.lane.b32.xlu0 %v574, 8
        %v765 = vpop.permute.xlu0 %764
        %766 = vrot.lane.b32.xlu0 %v576, 8
        %v767 = vpop.permute.xlu0 %766
        %768 = vrot.lane.b32.xlu0 %v579, 8
        %v769 = vpop.permute.xlu0 %768
        %770 = vrot.lane.b32.xlu0 %v581, 8
        %v771 = vpop.permute.xlu0 %770
        %772 = vrot.lane.b32.xlu0 %v584, 8
        %v773 = vpop.permute.xlu0 %772
        %774 = vrot.lane.b32.xlu0 %v586, 8
        %v775 = vpop.permute.xlu0 %774
        %776 = vrot.lane.b32.xlu0 %v589, 8
        %v777 = vpop.permute.xlu0 %776
        %778 = vrot.lane.b32.xlu0 %v591, 8
        %v779 = vpop.permute.xlu0 %778
        %780 = vrot.lane.b32.xlu0 %v594, 8
        %v781 = vpop.permute.xlu0 %780
        %782 = vrot.lane.b32.xlu0 %v596, 8
        %v783 = vpop.permute.xlu0 %782
        %784 = vrot.lane.b32.xlu0 %v599, 8
        %v785 = vpop.permute.xlu0 %784
        %786 = vrot.lane.b32.xlu0 %v601, 8
        %v787 = vpop.permute.xlu0 %786
        %820 = vrot.lane.b32.xlu0 %v341, 12
        %v821 = vpop.permute.xlu0 %820
        %822 = vrot.lane.b32.xlu0 %v342, 12
        %v823 = vpop.permute.xlu0 %822
        %824 = vrot.lane.b32.xlu0 %v344, 12
        %v825 = vpop.permute.xlu0 %824
        %826 = vrot.lane.b32.xlu0 %v345, 12
        %v827 = vpop.permute.xlu0 %826
        %828 = vrot.lane.b32.xlu0 %v347, 12
        %v829 = vpop.permute.xlu0 %828
        %830 = vrot.lane.b32.xlu0 %v348, 12
        %v831 = vpop.permute.xlu0 %830
        %832 = vrot.lane.b32.xlu0 %v350, 12
        %v833 = vpop.permute.xlu0 %832
        %834 = vrot.lane.b32.xlu0 %v351, 12
        %v835 = vpop.permute.xlu0 %834
        %836 = vrot.lane.b32.xlu0 %v353, 12
        %v837 = vpop.permute.xlu0 %836
        %838 = vrot.lane.b32.xlu0 %v354, 12
        %v839 = vpop.permute.xlu0 %838
        %840 = vrot.lane.b32.xlu0 %v356, 12
        %v841 = vpop.permute.xlu0 %840
        %842 = vrot.lane.b32.xlu0 %v357, 12
        %v843 = vpop.permute.xlu0 %842
        %844 = vrot.lane.b32.xlu0 %v359, 12
        %v845 = vpop.permute.xlu0 %844
        %846 = vrot.lane.b32.xlu0 %v360, 12
        %v847 = vpop.permute.xlu0 %846
        %848 = vrot.lane.b32.xlu0 %v362, 12
        %v849 = vpop.permute.xlu0 %848
        %850 = vrot.lane.b32.xlu0 %v363, 12
        %v851 = vpop.permute.xlu0 %850
        %852 = vrot.lane.b32.xlu0 %v365, 12
        %v853 = vpop.permute.xlu0 %852
        %854 = vrot.lane.b32.xlu0 %v366, 12
        %v855 = vpop.permute.xlu0 %854
        %856 = vrot.lane.b32.xlu0 %v368, 12
        %v857 = vpop.permute.xlu0 %856
        %858 = vrot.lane.b32.xlu0 %v369, 12
        %v859 = vpop.permute.xlu0 %858
        %860 = vrot.lane.b32.xlu0 %v371, 12
        %v861 = vpop.permute.xlu0 %860
        %862 = vrot.lane.b32.xlu0 %v372, 12
        %v863 = vpop.permute.xlu0 %862
        %864 = vrot.lane.b32.xlu0 %v374, 12
        %v865 = vpop.permute.xlu0 %864
        %866 = vrot.lane.b32.xlu0 %v375, 12
        %v867 = vpop.permute.xlu0 %866
        %868 = vrot.lane.b32.xlu0 %v377, 12
        %v869 = vpop.permute.xlu0 %868
        %870 = vrot.lane.b32.xlu0 %v378, 12
        %v871 = vpop.permute.xlu0 %870
        %872 = vrot.lane.b32.xlu0 %v380, 12
        %v873 = vpop.permute.xlu0 %872
        %874 = vrot.lane.b32.xlu0 %v381, 12
        %v875 = vpop.permute.xlu0 %874
        %876 = vrot.lane.b32.xlu0 %v383, 12
        %v877 = vpop.permute.xlu0 %876
        %878 = vrot.lane.b32.xlu0 %v384, 12
        %v879 = vpop.permute.xlu0 %878
        %880 = vrot.lane.b32.xlu0 %v386, 12
        %v881 = vpop.permute.xlu0 %880
        %882 = vrot.lane.b32.xlu0 %v387, 12
        %v883 = vpop.permute.xlu0 %882
        %916 = vrot.lane.b32.xlu0 %v448, 16
        %v917 = vpop.permute.xlu0 %916
        %918 = vrot.lane.b32.xlu0 %v450, 16
        %v919 = vpop.permute.xlu0 %918
        %920 = vrot.lane.b32.xlu0 %v453, 16
        %v921 = vpop.permute.xlu0 %920
        %922 = vrot.lane.b32.xlu0 %v455, 16
        %v923 = vpop.permute.xlu0 %922
        %924 = vrot.lane.b32.xlu0 %v458, 16
        %v925 = vpop.permute.xlu0 %924
        %926 = vrot.lane.b32.xlu0 %v460, 16
        %v927 = vpop.permute.xlu0 %926
        %928 = vrot.lane.b32.xlu0 %v463, 16
        %v929 = vpop.permute.xlu0 %928
        %930 = vrot.lane.b32.xlu0 %v465, 16
        %v931 = vpop.permute.xlu0 %930
        %932 = vrot.lane.b32.xlu0 %v468, 16
        %v933 = vpop.permute.xlu0 %932
        %934 = vrot.lane.b32.xlu0 %v470, 16
        %v935 = vpop.permute.xlu0 %934
        %936 = vrot.lane.b32.xlu0 %v473, 16
        %v937 = vpop.permute.xlu0 %936
        %938 = vrot.lane.b32.xlu0 %v475, 16
        %v939 = vpop.permute.xlu0 %938
        %940 = vrot.lane.b32.xlu0 %v478, 16
        %v941 = vpop.permute.xlu0 %940
        %942 = vrot.lane.b32.xlu0 %v480, 16
        %v943 = vpop.permute.xlu0 %942
        %944 = vrot.lane.b32.xlu0 %v483, 16
        %v945 = vpop.permute.xlu0 %944
        %946 = vrot.lane.b32.xlu0 %v485, 16
        %v947 = vpop.permute.xlu0 %946
        %948 = vrot.lane.b32.xlu0 %v488, 16
        %v949 = vpop.permute.xlu0 %948
        %950 = vrot.lane.b32.xlu0 %v490, 16
        %v951 = vpop.permute.xlu0 %950
        %952 = vrot.lane.b32.xlu0 %v493, 16
        %v953 = vpop.permute.xlu0 %952
        %954 = vrot.lane.b32.xlu0 %v495, 16
        %v955 = vpop.permute.xlu0 %954
        %956 = vrot.lane.b32.xlu0 %v498, 16
        %v957 = vpop.permute.xlu0 %956
        %958 = vrot.lane.b32.xlu0 %v500, 16
        %v959 = vpop.permute.xlu0 %958
        %960 = vrot.lane.b32.xlu0 %v503, 16
        %v961 = vpop.permute.xlu0 %960
        %962 = vrot.lane.b32.xlu0 %v505, 16
        %v963 = vpop.permute.xlu0 %962
        %964 = vrot.lane.b32.xlu0 %v508, 16
        %v965 = vpop.permute.xlu0 %964
        %966 = vrot.lane.b32.xlu0 %v510, 16
        %v967 = vpop.permute.xlu0 %966
        %968 = vrot.lane.b32.xlu0 %v513, 16
        %v969 = vpop.permute.xlu0 %968
        %970 = vrot.lane.b32.xlu0 %v515, 16
        %v971 = vpop.permute.xlu0 %970
        %972 = vrot.lane.b32.xlu0 %v518, 16
        %v973 = vpop.permute.xlu0 %972
        %974 = vrot.lane.b32.xlu0 %v520, 16
        %v975 = vpop.permute.xlu0 %974
        %976 = vrot.lane.b32.xlu0 %v607, 16
        %v977 = vpop.permute.xlu0 %976
        %978 = vrot.lane.b32.xlu0 %v609, 16
        %v979 = vpop.permute.xlu0 %978
        %1012 = vrot.lane.b32.xlu0 %v529, 20
        %v1013 = vpop.permute.xlu0 %1012
        %1014 = vrot.lane.b32.xlu0 %v531, 20
        %v1015 = vpop.permute.xlu0 %1014
        %1016 = vrot.lane.b32.xlu0 %v534, 20
        %v1017 = vpop.permute.xlu0 %1016
        %1018 = vrot.lane.b32.xlu0 %v536, 20
        %v1019 = vpop.permute.xlu0 %1018
        %1020 = vrot.lane.b32.xlu0 %v539, 20
        %v1021 = vpop.permute.xlu0 %1020
        %1022 = vrot.lane.b32.xlu0 %v541, 20
        %v1023 = vpop.permute.xlu0 %1022
        %1024 = vrot.lane.b32.xlu0 %v544, 20
        %v1025 = vpop.permute.xlu0 %1024
        %1026 = vrot.lane.b32.xlu0 %v546, 20
        %v1027 = vpop.permute.xlu0 %1026
        %1028 = vrot.lane.b32.xlu0 %v549, 20
        %v1029 = vpop.permute.xlu0 %1028
        %1030 = vrot.lane.b32.xlu0 %v551, 20
        %v1031 = vpop.permute.xlu0 %1030
        %1032 = vrot.lane.b32.xlu0 %v554, 20
        %v1033 = vpop.permute.xlu0 %1032
        %1034 = vrot.lane.b32.xlu0 %v556, 20
        %v1035 = vpop.permute.xlu0 %1034
        %1036 = vrot.lane.b32.xlu0 %v559, 20
        %v1037 = vpop.permute.xlu0 %1036
        %1038 = vrot.lane.b32.xlu0 %v561, 20
        %v1039 = vpop.permute.xlu0 %1038
        %1040 = vrot.lane.b32.xlu0 %v564, 20
        %v1041 = vpop.permute.xlu0 %1040
        %1042 = vrot.lane.b32.xlu0 %v566, 20
        %v1043 = vpop.permute.xlu0 %1042
        %1044 = vrot.lane.b32.xlu0 %v569, 20
        %v1045 = vpop.permute.xlu0 %1044
        %1046 = vrot.lane.b32.xlu0 %v571, 20
        %v1047 = vpop.permute.xlu0 %1046
        %1048 = vrot.lane.b32.xlu0 %v574, 20
        %v1049 = vpop.permute.xlu0 %1048
        %1050 = vrot.lane.b32.xlu0 %v576, 20
        %v1051 = vpop.permute.xlu0 %1050
        %1052 = vrot.lane.b32.xlu0 %v579, 20
        %v1053 = vpop.permute.xlu0 %1052
        %1054 = vrot.lane.b32.xlu0 %v581, 20
        %v1055 = vpop.permute.xlu0 %1054
        %1056 = vrot.lane.b32.xlu0 %v584, 20
        %v1057 = vpop.permute.xlu0 %1056
        %1058 = vrot.lane.b32.xlu0 %v586, 20
        %v1059 = vpop.permute.xlu0 %1058
        %1060 = vrot.lane.b32.xlu0 %v589, 20
        %v1061 = vpop.permute.xlu0 %1060
        %1062 = vrot.lane.b32.xlu0 %v591, 20
        %v1063 = vpop.permute.xlu0 %1062
        %1064 = vrot.lane.b32.xlu0 %v594, 20
        %v1065 = vpop.permute.xlu0 %1064
        %1066 = vrot.lane.b32.xlu0 %v596, 20
        %v1067 = vpop.permute.xlu0 %1066
        %1068 = vrot.lane.b32.xlu0 %v599, 20
        %v1069 = vpop.permute.xlu0 %1068
        %1070 = vrot.lane.b32.xlu0 %v601, 20
        %v1071 = vpop.permute.xlu0 %1070
        %1072 = vrot.lane.b32.xlu0 %v612, 20
        %v1073 = vpop.permute.xlu0 %1072
        %1074 = vrot.lane.b32.xlu0 %v614, 20
        %v1075 = vpop.permute.xlu0 %1074
        %1108 = vrot.lane.b32.xlu0 %v344, 24
        %v1109 = vpop.permute.xlu0 %1108
        %1110 = vrot.lane.b32.xlu0 %v345, 24
        %v1111 = vpop.permute.xlu0 %1110
        %1112 = vrot.lane.b32.xlu0 %v347, 24
        %v1113 = vpop.permute.xlu0 %1112
        %1114 = vrot.lane.b32.xlu0 %v348, 24
        %v1115 = vpop.permute.xlu0 %1114
        %1116 = vrot.lane.b32.xlu0 %v350, 24
        %v1117 = vpop.permute.xlu0 %1116
        %1118 = vrot.lane.b32.xlu0 %v351, 24
        %v1119 = vpop.permute.xlu0 %1118
        %1120 = vrot.lane.b32.xlu0 %v353, 24
        %v1121 = vpop.permute.xlu0 %1120
        %1122 = vrot.lane.b32.xlu0 %v354, 24
        %v1123 = vpop.permute.xlu0 %1122
        %1124 = vrot.lane.b32.xlu0 %v356, 24
        %v1125 = vpop.permute.xlu0 %1124
        %1126 = vrot.lane.b32.xlu0 %v357, 24
        %v1127 = vpop.permute.xlu0 %1126
        %1128 = vrot.lane.b32.xlu0 %v359, 24
        %v1129 = vpop.permute.xlu0 %1128
        %1130 = vrot.lane.b32.xlu0 %v360, 24
        %v1131 = vpop.permute.xlu0 %1130
        %1132 = vrot.lane.b32.xlu0 %v362, 24
        %v1133 = vpop.permute.xlu0 %1132
        %1134 = vrot.lane.b32.xlu0 %v363, 24
        %v1135 = vpop.permute.xlu0 %1134
        %1136 = vrot.lane.b32.xlu0 %v365, 24
        %v1137 = vpop.permute.xlu0 %1136
        %1138 = vrot.lane.b32.xlu0 %v366, 24
        %v1139 = vpop.permute.xlu0 %1138
        %1140 = vrot.lane.b32.xlu0 %v368, 24
        %v1141 = vpop.permute.xlu0 %1140
        %1142 = vrot.lane.b32.xlu0 %v369, 24
        %v1143 = vpop.permute.xlu0 %1142
        %1144 = vrot.lane.b32.xlu0 %v371, 24
        %v1145 = vpop.permute.xlu0 %1144
        %1146 = vrot.lane.b32.xlu0 %v372, 24
        %v1147 = vpop.permute.xlu0 %1146
        %1148 = vrot.lane.b32.xlu0 %v374, 24
        %v1149 = vpop.permute.xlu0 %1148
        %1150 = vrot.lane.b32.xlu0 %v375, 24
        %v1151 = vpop.permute.xlu0 %1150
        %1152 = vrot.lane.b32.xlu0 %v377, 24
        %v1153 = vpop.permute.xlu0 %1152
        %1154 = vrot.lane.b32.xlu0 %v378, 24
        %v1155 = vpop.permute.xlu0 %1154
        %1156 = vrot.lane.b32.xlu0 %v380, 24
        %v1157 = vpop.permute.xlu0 %1156
        %1158 = vrot.lane.b32.xlu0 %v381, 24
        %v1159 = vpop.permute.xlu0 %1158
        %1160 = vrot.lane.b32.xlu0 %v383, 24
        %v1161 = vpop.permute.xlu0 %1160
        %1162 = vrot.lane.b32.xlu0 %v384, 24
        %v1163 = vpop.permute.xlu0 %1162
        %1164 = vrot.lane.b32.xlu0 %v386, 24
        %v1165 = vpop.permute.xlu0 %1164
        %1166 = vrot.lane.b32.xlu0 %v387, 24
        %v1167 = vpop.permute.xlu0 %1166
        %1168 = vrot.lane.b32.xlu0 %v389, 24
        %v1169 = vpop.permute.xlu0 %1168
        %1170 = vrot.lane.b32.xlu0 %v390, 24
        %v1171 = vpop.permute.xlu0 %1170
        %1204 = vrot.lane.b32.xlu0 %v453, 28
        %v1205 = vpop.permute.xlu0 %1204
        %1206 = vrot.lane.b32.xlu0 %v455, 28
        %v1207 = vpop.permute.xlu0 %1206
        %1208 = vrot.lane.b32.xlu0 %v458, 28
        %v1209 = vpop.permute.xlu0 %1208
        %1210 = vrot.lane.b32.xlu0 %v460, 28
        %v1211 = vpop.permute.xlu0 %1210
        %1212 = vrot.lane.b32.xlu0 %v463, 28
        %v1213 = vpop.permute.xlu0 %1212
        %1214 = vrot.lane.b32.xlu0 %v465, 28
        %v1215 = vpop.permute.xlu0 %1214
        %1216 = vrot.lane.b32.xlu0 %v468, 28
        %v1217 = vpop.permute.xlu0 %1216
        %1218 = vrot.lane.b32.xlu0 %v470, 28
        %v1219 = vpop.permute.xlu0 %1218
        %1220 = vrot.lane.b32.xlu0 %v473, 28
        %v1221 = vpop.permute.xlu0 %1220
        %1222 = vrot.lane.b32.xlu0 %v475, 28
        %v1223 = vpop.permute.xlu0 %1222
        %1224 = vrot.lane.b32.xlu0 %v478, 28
        %v1225 = vpop.permute.xlu0 %1224
        %1226 = vrot.lane.b32.xlu0 %v480, 28
        %v1227 = vpop.permute.xlu0 %1226
        %1228 = vrot.lane.b32.xlu0 %v483, 28
        %v1229 = vpop.permute.xlu0 %1228
        %1230 = vrot.lane.b32.xlu0 %v485, 28
        %v1231 = vpop.permute.xlu0 %1230
        %1232 = vrot.lane.b32.xlu0 %v488, 28
        %v1233 = vpop.permute.xlu0 %1232
        %1234 = vrot.lane.b32.xlu0 %v490, 28
        %v1235 = vpop.permute.xlu0 %1234
        %1236 = vrot.lane.b32.xlu0 %v493, 28
        %v1237 = vpop.permute.xlu0 %1236
        %1238 = vrot.lane.b32.xlu0 %v495, 28
        %v1239 = vpop.permute.xlu0 %1238
        %1240 = vrot.lane.b32.xlu0 %v498, 28
        %v1241 = vpop.permute.xlu0 %1240
        %1242 = vrot.lane.b32.xlu0 %v500, 28
        %v1243 = vpop.permute.xlu0 %1242
        %1244 = vrot.lane.b32.xlu0 %v503, 28
        %v1245 = vpop.permute.xlu0 %1244
        %1246 = vrot.lane.b32.xlu0 %v505, 28
        %v1247 = vpop.permute.xlu0 %1246
        %1248 = vrot.lane.b32.xlu0 %v508, 28
        %v1249 = vpop.permute.xlu0 %1248
        %1250 = vrot.lane.b32.xlu0 %v510, 28
        %v1251 = vpop.permute.xlu0 %1250
        %1252 = vrot.lane.b32.xlu0 %v513, 28
        %v1253 = vpop.permute.xlu0 %1252
        %1254 = vrot.lane.b32.xlu0 %v515, 28
        %v1255 = vpop.permute.xlu0 %1254
        %1256 = vrot.lane.b32.xlu0 %v518, 28
        %v1257 = vpop.permute.xlu0 %1256
        %1258 = vrot.lane.b32.xlu0 %v520, 28
        %v1259 = vpop.permute.xlu0 %1258
        %1260 = vrot.lane.b32.xlu0 %v607, 28
        %v1261 = vpop.permute.xlu0 %1260
        %1262 = vrot.lane.b32.xlu0 %v609, 28
        %v1263 = vpop.permute.xlu0 %1262
        %1264 = vrot.lane.b32.xlu0 %v620, 28
        %v1265 = vpop.permute.xlu0 %1264
        %1266 = vrot.lane.b32.xlu0 %v622, 28
        %v1267 = vpop.permute.xlu0 %1266
        %1300 = vrot.lane.b32.xlu0 %v534, 32
        %v1301 = vpop.permute.xlu0 %1300
        %1302 = vrot.lane.b32.xlu0 %v536, 32
        %v1303 = vpop.permute.xlu0 %1302
        %1304 = vrot.lane.b32.xlu0 %v539, 32
        %v1305 = vpop.permute.xlu0 %1304
        %1306 = vrot.lane.b32.xlu0 %v541, 32
        %v1307 = vpop.permute.xlu0 %1306
        %1308 = vrot.lane.b32.xlu0 %v544, 32
        %v1309 = vpop.permute.xlu0 %1308
        %1310 = vrot.lane.b32.xlu0 %v546, 32
        %v1311 = vpop.permute.xlu0 %1310
        %1312 = vrot.lane.b32.xlu0 %v549, 32
        %v1313 = vpop.permute.xlu0 %1312
        %1314 = vrot.lane.b32.xlu0 %v551, 32
        %v1315 = vpop.permute.xlu0 %1314
        %1316 = vrot.lane.b32.xlu0 %v554, 32
        %v1317 = vpop.permute.xlu0 %1316
        %1318 = vrot.lane.b32.xlu0 %v556, 32
        %v1319 = vpop.permute.xlu0 %1318
        %1320 = vrot.lane.b32.xlu0 %v559, 32
        %v1321 = vpop.permute.xlu0 %1320
        %1322 = vrot.lane.b32.xlu0 %v561, 32
        %v1323 = vpop.permute.xlu0 %1322
        %1324 = vrot.lane.b32.xlu0 %v564, 32
        %v1325 = vpop.permute.xlu0 %1324
        %1326 = vrot.lane.b32.xlu0 %v566, 32
        %v1327 = vpop.permute.xlu0 %1326
        %1328 = vrot.lane.b32.xlu0 %v569, 32
        %v1329 = vpop.permute.xlu0 %1328
        %1330 = vrot.lane.b32.xlu0 %v571, 32
        %v1331 = vpop.permute.xlu0 %1330
        %1332 = vrot.lane.b32.xlu0 %v574, 32
        %v1333 = vpop.permute.xlu0 %1332
        %1334 = vrot.lane.b32.xlu0 %v576, 32
        %v1335 = vpop.permute.xlu0 %1334
        %1336 = vrot.lane.b32.xlu0 %v579, 32
        %v1337 = vpop.permute.xlu0 %1336
        %1338 = vrot.lane.b32.xlu0 %v581, 32
        %v1339 = vpop.permute.xlu0 %1338
        %1340 = vrot.lane.b32.xlu0 %v584, 32
        %v1341 = vpop.permute.xlu0 %1340
        %1342 = vrot.lane.b32.xlu0 %v586, 32
        %v1343 = vpop.permute.xlu0 %1342
        %1344 = vrot.lane.b32.xlu0 %v589, 32
        %v1345 = vpop.permute.xlu0 %1344
        %1346 = vrot.lane.b32.xlu0 %v591, 32
        %v1347 = vpop.permute.xlu0 %1346
        %1348 = vrot.lane.b32.xlu0 %v594, 32
        %v1349 = vpop.permute.xlu0 %1348
        %1350 = vrot.lane.b32.xlu0 %v596, 32
        %v1351 = vpop.permute.xlu0 %1350
        %1352 = vrot.lane.b32.xlu0 %v599, 32
        %v1353 = vpop.permute.xlu0 %1352
        %1354 = vrot.lane.b32.xlu0 %v601, 32
        %v1355 = vpop.permute.xlu0 %1354
        %1356 = vrot.lane.b32.xlu0 %v612, 32
        %v1357 = vpop.permute.xlu0 %1356
        %1358 = vrot.lane.b32.xlu0 %v614, 32
        %v1359 = vpop.permute.xlu0 %1358
        %1360 = vrot.lane.b32.xlu0 %v625, 32
        %v1361 = vpop.permute.xlu0 %1360
        %1362 = vrot.lane.b32.xlu0 %v627, 32
        %v1363 = vpop.permute.xlu0 %1362
        %v1396 = vsel %vm217, %v338, %v629
        %v1397 = vsel %vm217, %v339, %v631
        %v1398 = vsel %vm217, %v341, %v633
        %v1399 = vsel %vm217, %v342, %v635
        %v1400 = vsel %vm217, %v344, %v637
        %v1401 = vsel %vm217, %v345, %v639
        %v1402 = vsel %vm217, %v347, %v641
        %v1403 = vsel %vm217, %v348, %v643
        %v1404 = vsel %vm217, %v350, %v645
        %v1405 = vsel %vm217, %v351, %v647
        %v1406 = vsel %vm217, %v353, %v649
        %v1407 = vsel %vm217, %v354, %v651
        %v1408 = vsel %vm217, %v356, %v653
        %v1409 = vsel %vm217, %v357, %v655
        %v1410 = vsel %vm217, %v359, %v657
        %v1411 = vsel %vm217, %v360, %v659
        %v1412 = vsel %vm217, %v362, %v661
        %v1413 = vsel %vm217, %v363, %v663
        %v1414 = vsel %vm217, %v365, %v665
        %v1415 = vsel %vm217, %v366, %v667
        %v1416 = vsel %vm217, %v368, %v669
        %v1417 = vsel %vm217, %v369, %v671
        %v1418 = vsel %vm217, %v371, %v673
        %v1419 = vsel %vm217, %v372, %v675
        %v1420 = vsel %vm217, %v374, %v677
        %v1421 = vsel %vm217, %v375, %v679
        %v1422 = vsel %vm217, %v377, %v681
        %v1423 = vsel %vm217, %v378, %v683
        %v1424 = vsel %vm217, %v380, %v685
        %v1425 = vsel %vm217, %v381, %v687
        %v1426 = vsel %vm217, %v383, %v689
        %v1427 = vsel %vm217, %v384, %v691
        %vm1428 = vcmask 64512
        %v1429 = vsel %vm1428, %v1396, %v725
        %v1430 = vsel %vm1428, %v1397, %v727
        %v1431 = vsel %vm1428, %v1398, %v729
        %v1432 = vsel %vm1428, %v1399, %v731
        %v1433 = vsel %vm1428, %v1400, %v733
        %v1434 = vsel %vm1428, %v1401, %v735
        %v1435 = vsel %vm1428, %v1402, %v737
        %v1436 = vsel %vm1428, %v1403, %v739
        %v1437 = vsel %vm1428, %v1404, %v741
        %v1438 = vsel %vm1428, %v1405, %v743
        %v1439 = vsel %vm1428, %v1406, %v745
        %v1440 = vsel %vm1428, %v1407, %v747
        %v1441 = vsel %vm1428, %v1408, %v749
        %v1442 = vsel %vm1428, %v1409, %v751
        %v1443 = vsel %vm1428, %v1410, %v753
        %v1444 = vsel %vm1428, %v1411, %v755
        %v1445 = vsel %vm1428, %v1412, %v757
        %v1446 = vsel %vm1428, %v1413, %v759
        %v1447 = vsel %vm1428, %v1414, %v761
        %v1448 = vsel %vm1428, %v1415, %v763
        %v1449 = vsel %vm1428, %v1416, %v765
        %v1450 = vsel %vm1428, %v1417, %v767
        %v1451 = vsel %vm1428, %v1418, %v769
        %v1452 = vsel %vm1428, %v1419, %v771
        %v1453 = vsel %vm1428, %v1420, %v773
        %v1454 = vsel %vm1428, %v1421, %v775
        %v1455 = vsel %vm1428, %v1422, %v777
        %v1456 = vsel %vm1428, %v1423, %v779
        %v1457 = vsel %vm1428, %v1424, %v781
        %v1458 = vsel %vm1428, %v1425, %v783
        %v1459 = vsel %vm1428, %v1426, %v785
        %v1460 = vsel %vm1428, %v1427, %v787
        %vm1461 = vcmask 97280
        %v1462 = vsel %vm1461, %v1429, %v821
        %v1463 = vsel %vm1461, %v1430, %v823
        %v1464 = vsel %vm1461, %v1431, %v825
        %v1465 = vsel %vm1461, %v1432, %v827
        %v1466 = vsel %vm1461, %v1433, %v829
        %v1467 = vsel %vm1461, %v1434, %v831
        %v1468 = vsel %vm1461, %v1435, %v833
        %v1469 = vsel %vm1461, %v1436, %v835
        %v1470 = vsel %vm1461, %v1437, %v837
        %v1471 = vsel %vm1461, %v1438, %v839
        %v1472 = vsel %vm1461, %v1439, %v841
        %v1473 = vsel %vm1461, %v1440, %v843
        %v1474 = vsel %vm1461, %v1441, %v845
        %v1475 = vsel %vm1461, %v1442, %v847
        %v1476 = vsel %vm1461, %v1443, %v849
        %v1477 = vsel %vm1461, %v1444, %v851
        %v1478 = vsel %vm1461, %v1445, %v853
        %v1479 = vsel %vm1461, %v1446, %v855
        %v1480 = vsel %vm1461, %v1447, %v857
        %v1481 = vsel %vm1461, %v1448, %v859
        %v1482 = vsel %vm1461, %v1449, %v861
        %v1483 = vsel %vm1461, %v1450, %v863
        %v1484 = vsel %vm1461, %v1451, %v865
        %v1485 = vsel %vm1461, %v1452, %v867
        %v1486 = vsel %vm1461, %v1453, %v869
        %v1487 = vsel %vm1461, %v1454, %v871
        %v1488 = vsel %vm1461, %v1455, %v873
        %v1489 = vsel %vm1461, %v1456, %v875
        %v1490 = vsel %vm1461, %v1457, %v877
        %v1491 = vsel %vm1461, %v1458, %v879
        %v1492 = vsel %vm1461, %v1459, %v881
        %v1493 = vsel %vm1461, %v1460, %v883
        %vm1494 = vcmask 130048
        %v1495 = vsel %vm1494, %v1462, %v917
        %v1496 = vsel %vm1494, %v1463, %v919
        %v1497 = vsel %vm1494, %v1464, %v921
        %v1498 = vsel %vm1494, %v1465, %v923
        %v1499 = vsel %vm1494, %v1466, %v925
        %v1500 = vsel %vm1494, %v1467, %v927
        %v1501 = vsel %vm1494, %v1468, %v929
        %v1502 = vsel %vm1494, %v1469, %v931
        %v1503 = vsel %vm1494, %v1470, %v933
        %v1504 = vsel %vm1494, %v1471, %v935
        %v1505 = vsel %vm1494, %v1472, %v937
        %v1506 = vsel %vm1494, %v1473, %v939
        %v1507 = vsel %vm1494, %v1474, %v941
        %v1508 = vsel %vm1494, %v1475, %v943
        %v1509 = vsel %vm1494, %v1476, %v945
        %v1510 = vsel %vm1494, %v1477, %v947
        %v1511 = vsel %vm1494, %v1478, %v949
        %v1512 = vsel %vm1494, %v1479, %v951
        %v1513 = vsel %vm1494, %v1480, %v953
        %v1514 = vsel %vm1494, %v1481, %v955
        %v1515 = vsel %vm1494, %v1482, %v957
        %v1516 = vsel %vm1494, %v1483, %v959
        %v1517 = vsel %vm1494, %v1484, %v961
        %v1518 = vsel %vm1494, %v1485, %v963
        %v1519 = vsel %vm1494, %v1486, %v965
        %v1520 = vsel %vm1494, %v1487, %v967
        %v1521 = vsel %vm1494, %v1488, %v969
        %v1522 = vsel %vm1494, %v1489, %v971
        %v1523 = vsel %vm1494, %v1490, %v973
        %v1524 = vsel %vm1494, %v1491, %v975
        %v1525 = vsel %vm1494, %v1492, %v977
        %v1526 = vsel %vm1494, %v1493, %v979
        %vm1527 = vcmask 162816
        %v1528 = vsel %vm1527, %v1495, %v1013
        %v1529 = vsel %vm1527, %v1496, %v1015
        %v1530 = vsel %vm1527, %v1497, %v1017
        %v1531 = vsel %vm1527, %v1498, %v1019
        %v1532 = vsel %vm1527, %v1499, %v1021
        %v1533 = vsel %vm1527, %v1500, %v1023
        %v1534 = vsel %vm1527, %v1501, %v1025
        %v1535 = vsel %vm1527, %v1502, %v1027
        %v1536 = vsel %vm1527, %v1503, %v1029
        %v1537 = vsel %vm1527, %v1504, %v1031
        %v1538 = vsel %vm1527, %v1505, %v1033
        %v1539 = vsel %vm1527, %v1506, %v1035
        %v1540 = vsel %vm1527, %v1507, %v1037
        %v1541 = vsel %vm1527, %v1508, %v1039
        %v1542 = vsel %vm1527, %v1509, %v1041
        %v1543 = vsel %vm1527, %v1510, %v1043
        %v1544 = vsel %vm1527, %v1511, %v1045
        %v1545 = vsel %vm1527, %v1512, %v1047
        %v1546 = vsel %vm1527, %v1513, %v1049
        %v1547 = vsel %vm1527, %v1514, %v1051
        %v1548 = vsel %vm1527, %v1515, %v1053
        %v1549 = vsel %vm1527, %v1516, %v1055
        %v1550 = vsel %vm1527, %v1517, %v1057
        %v1551 = vsel %vm1527, %v1518, %v1059
        %v1552 = vsel %vm1527, %v1519, %v1061
        %v1553 = vsel %vm1527, %v1520, %v1063
        %v1554 = vsel %vm1527, %v1521, %v1065
        %v1555 = vsel %vm1527, %v1522, %v1067
        %v1556 = vsel %vm1527, %v1523, %v1069
        %v1557 = vsel %vm1527, %v1524, %v1071
        %v1558 = vsel %vm1527, %v1525, %v1073
        %v1559 = vsel %vm1527, %v1526, %v1075
        %vm1560 = vcmask 195584
        %v1561 = vsel %vm1560, %v1528, %v1109
        %v1562 = vsel %vm1560, %v1529, %v1111
        %v1563 = vsel %vm1560, %v1530, %v1113
        %v1564 = vsel %vm1560, %v1531, %v1115
        %v1565 = vsel %vm1560, %v1532, %v1117
        %v1566 = vsel %vm1560, %v1533, %v1119
        %v1567 = vsel %vm1560, %v1534, %v1121
        %v1568 = vsel %vm1560, %v1535, %v1123
        %v1569 = vsel %vm1560, %v1536, %v1125
        %v1570 = vsel %vm1560, %v1537, %v1127
        %v1571 = vsel %vm1560, %v1538, %v1129
        %v1572 = vsel %vm1560, %v1539, %v1131
        %v1573 = vsel %vm1560, %v1540, %v1133
        %v1574 = vsel %vm1560, %v1541, %v1135
        %v1575 = vsel %vm1560, %v1542, %v1137
        %v1576 = vsel %vm1560, %v1543, %v1139
        %v1577 = vsel %vm1560, %v1544, %v1141
        %v1578 = vsel %vm1560, %v1545, %v1143
        %v1579 = vsel %vm1560, %v1546, %v1145
        %v1580 = vsel %vm1560, %v1547, %v1147
        %v1581 = vsel %vm1560, %v1548, %v1149
        %v1582 = vsel %vm1560, %v1549, %v1151
        %v1583 = vsel %vm1560, %v1550, %v1153
        %v1584 = vsel %vm1560, %v1551, %v1155
        %v1585 = vsel %vm1560, %v1552, %v1157
        %v1586 = vsel %vm1560, %v1553, %v1159
        %v1587 = vsel %vm1560, %v1554, %v1161
        %v1588 = vsel %vm1560, %v1555, %v1163
        %v1589 = vsel %vm1560, %v1556, %v1165
        %v1590 = vsel %vm1560, %v1557, %v1167
        %v1591 = vsel %vm1560, %v1558, %v1169
        %v1592 = vsel %vm1560, %v1559, %v1171
        %vm1593 = vcmask 228352
        %v1594 = vsel %vm1593, %v1561, %v1205
        %v1595 = vsel %vm1593, %v1562, %v1207
        %v1596 = vsel %vm1593, %v1563, %v1209
        %v1597 = vsel %vm1593, %v1564, %v1211
        %v1598 = vsel %vm1593, %v1565, %v1213
        %v1599 = vsel %vm1593, %v1566, %v1215
        %v1600 = vsel %vm1593, %v1567, %v1217
        %v1601 = vsel %vm1593, %v1568, %v1219
        %v1602 = vsel %vm1593, %v1569, %v1221
        %v1603 = vsel %vm1593, %v1570, %v1223
        %v1604 = vsel %vm1593, %v1571, %v1225
        %v1605 = vsel %vm1593, %v1572, %v1227
        %v1606 = vsel %vm1593, %v1573, %v1229
        %v1607 = vsel %vm1593, %v1574, %v1231
        %v1608 = vsel %vm1593, %v1575, %v1233
        %v1609 = vsel %vm1593, %v1576, %v1235
        %v1610 = vsel %vm1593, %v1577, %v1237
        %v1611 = vsel %vm1593, %v1578, %v1239
        %v1612 = vsel %vm1593, %v1579, %v1241
        %v1613 = vsel %vm1593, %v1580, %v1243
        %v1614 = vsel %vm1593, %v1581, %v1245
        %v1615 = vsel %vm1593, %v1582, %v1247
        %v1616 = vsel %vm1593, %v1583, %v1249
        %v1617 = vsel %vm1593, %v1584, %v1251
        %v1618 = vsel %vm1593, %v1585, %v1253
        %v1619 = vsel %vm1593, %v1586, %v1255
        %v1620 = vsel %vm1593, %v1587, %v1257
        %v1621 = vsel %vm1593, %v1588, %v1259
        %v1622 = vsel %vm1593, %v1589, %v1261
        %v1623 = vsel %vm1593, %v1590, %v1263
        %v1624 = vsel %vm1593, %v1591, %v1265
        %v1625 = vsel %vm1593, %v1592, %v1267
        %vm1626 = vcmask 261120
        %v1627 = vsel %vm1626, %v1594, %v1301
        %v1628 = vsel %vm1626, %v1595, %v1303
        %v1629 = vsel %vm1626, %v1596, %v1305
        %v1630 = vsel %vm1626, %v1597, %v1307
        %v1631 = vsel %vm1626, %v1598, %v1309
        %v1632 = vsel %vm1626, %v1599, %v1311
        %v1633 = vsel %vm1626, %v1600, %v1313
        %v1634 = vsel %vm1626, %v1601, %v1315
        %v1635 = vsel %vm1626, %v1602, %v1317
        %v1636 = vsel %vm1626, %v1603, %v1319
        %v1637 = vsel %vm1626, %v1604, %v1321
        %v1638 = vsel %vm1626, %v1605, %v1323
        %v1639 = vsel %vm1626, %v1606, %v1325
        %v1640 = vsel %vm1626, %v1607, %v1327
        %v1641 = vsel %vm1626, %v1608, %v1329
        %v1642 = vsel %vm1626, %v1609, %v1331
        %v1643 = vsel %vm1626, %v1610, %v1333
        %v1644 = vsel %vm1626, %v1611, %v1335
        %v1645 = vsel %vm1626, %v1612, %v1337
        %v1646 = vsel %vm1626, %v1613, %v1339
        %v1647 = vsel %vm1626, %v1614, %v1341
        %v1648 = vsel %vm1626, %v1615, %v1343
        %v1649 = vsel %vm1626, %v1616, %v1345
        %v1650 = vsel %vm1626, %v1617, %v1347
        %v1651 = vsel %vm1626, %v1618, %v1349
        %v1652 = vsel %vm1626, %v1619, %v1351
        %v1653 = vsel %vm1626, %v1620, %v1353
        %v1654 = vsel %vm1626, %v1621, %v1355
        %v1655 = vsel %vm1626, %v1622, %v1357
        %v1656 = vsel %vm1626, %v1623, %v1359
        %v1657 = vsel %vm1626, %v1624, %v1361
        %v1658 = vsel %vm1626, %v1625, %v1363
        %v1659 = vld [vmem:[%s1] sm:$0xff]
        %v1660 = vld [vmem:[%s1 + $0x8] sm:$0xff]
        %v1661 = vld [vmem:[%s1 + $0x10] sm:$0xff]
        %v1662 = vld [vmem:[%s1 + $0x18] sm:$0xff]
        %v1663 = vld [vmem:[%s1 + $0x20] sm:$0xf]
        %vm1664 = vcmask 293888
        %v1666 = vsel %vm1664, %v1627, 0
        %v1669 = vsel %vm1664, %v1628, 0
        %v1672 = vsel %vm1664, %v1629, 0
        %v1675 = vsel %vm1664, %v1630, 0
        %v1678 = vsel %vm1664, %v1631, 0
        %v1681 = vsel %vm1664, %v1632, 0
        %v1684 = vsel %vm1664, %v1633, 0
        %v1687 = vsel %vm1664, %v1634, 0
        %v1690 = vsel %vm1664, %v1635, 0
        %v1693 = vsel %vm1664, %v1636, 0
        %v1696 = vsel %vm1664, %v1637, 0
        %v1699 = vsel %vm1664, %v1638, 0
        %v1702 = vsel %vm1664, %v1639, 0
        %v1705 = vsel %vm1664, %v1640, 0
        %v1708 = vsel %vm1664, %v1641, 0
        %v1711 = vsel %vm1664, %v1642, 0
        %v1714 = vsel %vm1664, %v1643, 0
        %v1717 = vsel %vm1664, %v1644, 0
        %v1720 = vsel %vm1664, %v1645, 0
        %v1723 = vsel %vm1664, %v1646, 0
        %v1726 = vsel %vm1664, %v1647, 0
        %v1729 = vsel %vm1664, %v1648, 0
        %v1732 = vsel %vm1664, %v1649, 0
        %v1735 = vsel %vm1664, %v1650, 0
        %v1738 = vsel %vm1664, %v1651, 0
        %v1741 = vsel %vm1664, %v1652, 0
        %v1744 = vsel %vm1664, %v1653, 0
        %v1747 = vsel %vm1664, %v1654, 0
        %v1750 = vsel %vm1664, %v1655, 0
        %v1753 = vsel %vm1664, %v1656, 0
        %v1756 = vsel %vm1664, %v1657, 0
        %v1759 = vsel %vm1664, %v1658, 0
        %vm1761 = vcmask 1043456
        %v1763 = vsel %vm1761, %v1663, 0
        %1765 = vmatprep.subr.mxu0 0.0
        %1766 = vmatpush1.msra.mxu0 %v1659
        %1767 = vmatprep.subr.mxu0 0.0
        %1768 = vmatpush1.msra.mxu0 %v1660
        %1769 = vmatprep.subr.mxu0 0.0
        %1770 = vmatpush1.msra.mxu0 %v1661
        %1771 = vmatprep.subr.mxu0 0.0
        %1772 = vmatpush1.msra.mxu0 %v1662
        %1773 = vmatprep.subr.mxu0 0.0
        %1774 = vmatpush1.msra.mxu0 %v1763
        %1775 = vmatprep.subr.mxu0 0.0
        %1776 = vmatpush1.msra.mxu0 0.0
        %1777 = vmatprep.subr.mxu0 0.0
        %1778 = vmatpush1.msra.mxu0 0.0
        %1779 = vmatprep.subr.mxu0 0.0
        %1780 = vmatpush1.msra.mxu0 0.0
        %1781 = vmatprep.subr.mxu0 0.0
        %1782 = vmatpush1.msra.mxu0 0.0
        %1783 = vmatprep.subr.mxu0 0.0
        %1784 = vmatpush1.msra.mxu0 0.0
        %1785 = vmatprep.subr.mxu0 0.0
        %1786 = vmatpush1.msra.mxu0 0.0
        %1787 = vmatprep.subr.mxu0 0.0
        %1788 = vmatpush1.msra.mxu0 0.0
        %1789 = vmatprep.subr.mxu0 0.0
        %1790 = vmatpush1.msra.mxu0 0.0
        %1791 = vmatprep.subr.mxu0 0.0
        %1792 = vmatpush1.msra.mxu0 0.0
        %1793 = vmatprep.subr.mxu0 0.0
        %1794 = vmatpush1.msra.mxu0 0.0
        %1795 = vmatprep.subr.mxu0 0.0
        %1796 = vmatpush1.msra.mxu0 0.0
        %1797 = vmatprep.subr.mxu0 0.0
        %1798 = vmatpush1.msra.mxu0 0.0
        %1799 = vmatprep.subr.mxu0 0.0
        %1800 = vmatpush1.msra.mxu0 0.0
        %1801 = vmatprep.subr.mxu0 0.0
        %1802 = vmatpush1.msra.mxu0 0.0
        %1803 = vmatprep.subr.mxu0 0.0
        %1804 = vmatpush1.msra.mxu0 0.0
        %1805 = vmatprep.subr.mxu0 0.0
        %1806 = vmatpush1.msra.mxu0 0.0
        %1807 = vmatprep.subr.mxu0 0.0
        %1808 = vmatpush1.msra.mxu0 0.0
        %1809 = vmatprep.subr.mxu0 0.0
        %1810 = vmatpush1.msra.mxu0 0.0
        %1811 = vmatprep.subr.mxu0 0.0
        %1812 = vmatpush1.msra.mxu0 0.0
        %1813 = vmatprep.subr.mxu0 0.0
        %1814 = vmatpush1.msra.mxu0 0.0
        %1815 = vmatprep.subr.mxu0 0.0
        %1816 = vmatpush1.msra.mxu0 0.0
        %1817 = vmatprep.subr.mxu0 0.0
        %1818 = vmatpush1.msra.mxu0 0.0
        %1819 = vmatprep.subr.mxu0 0.0
        %1820 = vmatpush1.msra.mxu0 0.0
        %1821 = vmatprep.subr.mxu0 0.0
        %1822 = vmatpush1.msra.mxu0 0.0
        %1823 = vmatprep.subr.mxu0 0.0
        %1824 = vmatpush1.msra.mxu0 0.0
        %1825 = vmatprep.subr.mxu0 0.0
        %1826 = vmatpush1.msra.mxu0 0.0
        %1827 = vmatprep.subr.mxu0 0.0
        %1828 = vmatpush1.msra.mxu0 0.0
        %1829 = vmatprep.mubr.f32.mxu0 0.0
        %1830 = vmatmul.mubr.f32.gmra.mrb[0].mxu0 %v1666
        %v1831 = vpop.f32.mrb[0].mxu0
        %v1832 = vadd.f32 0.0, %v1831
        %v1833 = vpop.f32.mrb[0].mxu0
        %1834 = vmatprep.mubr.f32.mxu0 0.0
        %1835 = vmatmul.mubr.f32.gmra.mrb[0].mxu0 %v1669
        %v1836 = vpop.f32.mrb[0].mxu0
        %v1837 = vadd.f32 0.0, %v1836
        %v1838 = vpop.f32.mrb[0].mxu0
        %1839 = vmatprep.mubr.f32.mxu0 0.0
        %1840 = vmatmul.mubr.f32.gmra.mrb[0].mxu0 %v1672
        %v1841 = vpop.f32.mrb[0].mxu0
        %v1842 = vadd.f32 0.0, %v1841
        %v1843 = vpop.f32.mrb[0].mxu0
        %1844 = vmatprep.mubr.f32.mxu0 0.0
        %1845 = vmatmul.mubr.f32.gmra.mrb[0].mxu0 %v1675
        %v1846 = vpop.f32.mrb[0].mxu0
        %v1847 = vadd.f32 0.0, %v1846
        %v1848 = vpop.f32.mrb[0].mxu0
        %1849 = vmatprep.mubr.f32.mxu0 0.0
        %1850 = vmatmul.mubr.f32.gmra.mrb[0].mxu0 %v1678
        %v1851 = vpop.f32.mrb[0].mxu0
        %v1852 = vadd.f32 0.0, %v1851
        %v1853 = vpop.f32.mrb[0].mxu0
        %1854 = vmatprep.mubr.f32.mxu0 0.0
        %1855 = vmatmul.mubr.f32.gmra.mrb[0].mxu0 %v1681
        %v1856 = vpop.f32.mrb[0].mxu0
        %v1857 = vadd.f32 0.0, %v1856
        %v1858 = vpop.f32.mrb[0].mxu0
        %1859 = vmatprep.mubr.f32.mxu0 0.0
        %1860 = vmatmul.mubr.f32.gmra.mrb[0].mxu0 %v1684
        %v1861 = vpop.f32.mrb[0].mxu0
        %v1862 = vadd.f32 0.0, %v1861
        %v1863 = vpop.f32.mrb[0].mxu0
        %1864 = vmatprep.mubr.f32.mxu0 0.0
        %1865 = vmatmul.mubr.f32.gmra.mrb[0].mxu0 %v1687
        %v1866 = vpop.f32.mrb[0].mxu0
        %v1867 = vadd.f32 0.0, %v1866
        %v1868 = vpop.f32.mrb[0].mxu0
        %1869 = vmatprep.mubr.f32.mxu0 0.0
        %1870 = vmatmul.mubr.f32.gmra.mrb[0].mxu0 %v1690
        %v1871 = vpop.f32.mrb[0].mxu0
        %v1872 = vadd.f32 0.0, %v1871
        %v1873 = vpop.f32.mrb[0].mxu0
        %1874 = vmatprep.mubr.f32.mxu0 0.0
        %1875 = vmatmul.mubr.f32.gmra.mrb[0].mxu0 %v1693
        %v1876 = vpop.f32.mrb[0].mxu0
        %v1877 = vadd.f32 0.0, %v1876
        %v1878 = vpop.f32.mrb[0].mxu0
        %1879 = vmatprep.mubr.f32.mxu0 0.0
        %1880 = vmatmul.mubr.f32.gmra.mrb[0].mxu0 %v1696
        %v1881 = vpop.f32.mrb[0].mxu0
        %v1882 = vadd.f32 0.0, %v1881
        %v1883 = vpop.f32.mrb[0].mxu0
        %1884 = vmatprep.mubr.f32.mxu0 0.0
        %1885 = vmatmul.mubr.f32.gmra.mrb[0].mxu0 %v1699
        %v1886 = vpop.f32.mrb[0].mxu0
        %v1887 = vadd.f32 0.0, %v1886
        %v1888 = vpop.f32.mrb[0].mxu0
        %1889 = vmatprep.mubr.f32.mxu0 0.0
        %1890 = vmatmul.mubr.f32.gmra.mrb[0].mxu0 %v1702
        %v1891 = vpop.f32.mrb[0].mxu0
        %v1892 = vadd.f32 0.0, %v1891
        %v1893 = vpop.f32.mrb[0].mxu0
        %1894 = vmatprep.mubr.f32.mxu0 0.0
        %1895 = vmatmul.mubr.f32.gmra.mrb[0].mxu0 %v1705
        %v1896 = vpop.f32.mrb[0].mxu0
        %v1897 = vadd.f32 0.0, %v1896
        %v1898 = vpop.f32.mrb[0].mxu0
        %1899 = vmatprep.mubr.f32.mxu0 0.0
        %1900 = vmatmul.mubr.f32.gmra.mrb[0].mxu0 %v1708
        %v1901 = vpop.f32.mrb[0].mxu0
        %v1902 = vadd.f32 0.0, %v1901
        %v1903 = vpop.f32.mrb[0].mxu0
        %1904 = vmatprep.mubr.f32.mxu0 0.0
        %1905 = vmatmul.mubr.f32.gmra.mrb[0].mxu0 %v1711
        %v1906 = vpop.f32.mrb[0].mxu0
        %v1907 = vadd.f32 0.0, %v1906
        %v1908 = vpop.f32.mrb[0].mxu0
        %1909 = vmatprep.mubr.f32.mxu0 0.0
        %1910 = vmatmul.mubr.f32.gmra.mrb[0].mxu0 %v1714
        %v1911 = vpop.f32.mrb[0].mxu0
        %v1912 = vadd.f32 0.0, %v1911
        %v1913 = vpop.f32.mrb[0].mxu0
        %1914 = vmatprep.mubr.f32.mxu0 0.0
        %1915 = vmatmul.mubr.f32.gmra.mrb[0].mxu0 %v1717
        %v1916 = vpop.f32.mrb[0].mxu0
        %v1917 = vadd.f32 0.0, %v1916
        %v1918 = vpop.f32.mrb[0].mxu0
        %1919 = vmatprep.mubr.f32.mxu0 0.0
        %1920 = vmatmul.mubr.f32.gmra.mrb[0].mxu0 %v1720
        %v1921 = vpop.f32.mrb[0].mxu0
        %v1922 = vadd.f32 0.0, %v1921
        %v1923 = vpop.f32.mrb[0].mxu0
        %1924 = vmatprep.mubr.f32.mxu0 0.0
        %1925 = vmatmul.mubr.f32.gmra.mrb[0].mxu0 %v1723
        %v1926 = vpop.f32.mrb[0].mxu0
        %v1927 = vadd.f32 0.0, %v1926
        %v1928 = vpop.f32.mrb[0].mxu0
        %1929 = vmatprep.mubr.f32.mxu0 0.0
        %1930 = vmatmul.mubr.f32.gmra.mrb[0].mxu0 %v1726
        %v1931 = vpop.f32.mrb[0].mxu0
        %v1932 = vadd.f32 0.0, %v1931
        %v1933 = vpop.f32.mrb[0].mxu0
        %1934 = vmatprep.mubr.f32.mxu0 0.0
        %1935 = vmatmul.mubr.f32.gmra.mrb[0].mxu0 %v1729
        %v1936 = vpop.f32.mrb[0].mxu0
        %v1937 = vadd.f32 0.0, %v1936
        %v1938 = vpop.f32.mrb[0].mxu0
        %1939 = vmatprep.mubr.f32.mxu0 0.0
        %1940 = vmatmul.mubr.f32.gmra.mrb[0].mxu0 %v1732
        %v1941 = vpop.f32.mrb[0].mxu0
        %v1942 = vadd.f32 0.0, %v1941
        %v1943 = vpop.f32.mrb[0].mxu0
        %1944 = vmatprep.mubr.f32.mxu0 0.0
        %1945 = vmatmul.mubr.f32.gmra.mrb[0].mxu0 %v1735
        %v1946 = vpop.f32.mrb[0].mxu0
        %v1947 = vadd.f32 0.0, %v1946
        %v1948 = vpop.f32.mrb[0].mxu0
        %1949 = vmatprep.mubr.f32.mxu0 0.0
        %1950 = vmatmul.mubr.f32.gmra.mrb[0].mxu0 %v1738
        %v1951 = vpop.f32.mrb[0].mxu0
        %v1952 = vadd.f32 0.0, %v1951
        %v1953 = vpop.f32.mrb[0].mxu0
        %1954 = vmatprep.mubr.f32.mxu0 0.0
        %1955 = vmatmul.mubr.f32.gmra.mrb[0].mxu0 %v1741
        %v1956 = vpop.f32.mrb[0].mxu0
        %v1957 = vadd.f32 0.0, %v1956
        %v1958 = vpop.f32.mrb[0].mxu0
        %1959 = vmatprep.mubr.f32.mxu0 0.0
        %1960 = vmatmul.mubr.f32.gmra.mrb[0].mxu0 %v1744
        %v1961 = vpop.f32.mrb[0].mxu0
        %v1962 = vadd.f32 0.0, %v1961
        %v1963 = vpop.f32.mrb[0].mxu0
        %1964 = vmatprep.mubr.f32.mxu0 0.0
        %1965 = vmatmul.mubr.f32.gmra.mrb[0].mxu0 %v1747
        %v1966 = vpop.f32.mrb[0].mxu0
        %v1967 = vadd.f32 0.0, %v1966
        %v1968 = vpop.f32.mrb[0].mxu0
        %1969 = vmatprep.mubr.f32.mxu0 0.0
        %1970 = vmatmul.mubr.f32.gmra.mrb[0].mxu0 %v1750
        %v1971 = vpop.f32.mrb[0].mxu0
        %v1972 = vadd.f32 0.0, %v1971
        %v1973 = vpop.f32.mrb[0].mxu0
        %1974 = vmatprep.mubr.f32.mxu0 0.0
        %1975 = vmatmul.mubr.f32.gmra.mrb[0].mxu0 %v1753
        %v1976 = vpop.f32.mrb[0].mxu0
        %v1977 = vadd.f32 0.0, %v1976
        %v1978 = vpop.f32.mrb[0].mxu0
        %1979 = vmatprep.mubr.f32.mxu0 0.0
        %1980 = vmatmul.mubr.f32.gmra.mrb[0].mxu0 %v1756
        %v1981 = vpop.f32.mrb[0].mxu0
        %v1982 = vadd.f32 0.0, %v1981
        %v1983 = vpop.f32.mrb[0].mxu0
        %1984 = vmatprep.mubr.f32.mxu0 0.0
        %1985 = vmatmul.mubr.f32.gmra.mrb[0].mxu0 %v1759
        %v1986 = vpop.f32.mrb[0].mxu0
        %v1987 = vadd.f32 0.0, %v1986
        %v1988 = vpop.f32.mrb[0].mxu0
        %1989 = vdwg.mxu0
        %1990 = vst.msk [vmem:[%s216] sm:$0xff] %vm1428, %v1832
        %1991 = vst.msk [vmem:[%s216 + $0x8] sm:$0xff] %vm1428, %v1837
        %1992 = vst.msk [vmem:[%s216 + $0x10] sm:$0xff] %vm1428, %v1842
        %1993 = vst.msk [vmem:[%s216 + $0x18] sm:$0xff] %vm1428, %v1847
        %1994 = vst.msk [vmem:[%s216 + $0x20] sm:$0xff] %vm1428, %v1852
        %1995 = vst.msk [vmem:[%s216 + $0x28] sm:$0xff] %vm1428, %v1857
        %1996 = vst.msk [vmem:[%s216 + $0x30] sm:$0xff] %vm1428, %v1862
        %1997 = vst.msk [vmem:[%s216 + $0x38] sm:$0xff] %vm1428, %v1867
        %1998 = vst.msk [vmem:[%s216 + $0x40] sm:$0xff] %vm1428, %v1872
        %1999 = vst.msk [vmem:[%s216 + $0x48] sm:$0xff] %vm1428, %v1877
        %2000 = vst.msk [vmem:[%s216 + $0x50] sm:$0xff] %vm1428, %v1882
        %2001 = vst.msk [vmem:[%s216 + $0x58] sm:$0xff] %vm1428, %v1887
        %2002 = vst.msk [vmem:[%s216 + $0x60] sm:$0xff] %vm1428, %v1892
        %2003 = vst.msk [vmem:[%s216 + $0x68] sm:$0xff] %vm1428, %v1897
        %2004 = vst.msk [vmem:[%s216 + $0x70] sm:$0xff] %vm1428, %v1902
        %2005 = vst.msk [vmem:[%s216 + $0x78] sm:$0xff] %vm1428, %v1907
        %2006 = vst.msk [vmem:[%s216 + $0x80] sm:$0xff] %vm1428, %v1912
        %2007 = vst.msk [vmem:[%s216 + $0x88] sm:$0xff] %vm1428, %v1917
        %2008 = vst.msk [vmem:[%s216 + $0x90] sm:$0xff] %vm1428, %v1922
        %2009 = vst.msk [vmem:[%s216 + $0x98] sm:$0xff] %vm1428, %v1927
        %2010 = vst.msk [vmem:[%s216 + $0xa0] sm:$0xff] %vm1428, %v1932
        %2011 = vst.msk [vmem:[%s216 + $0xa8] sm:$0xff] %vm1428, %v1937
        %2012 = vst.msk [vmem:[%s216 + $0xb0] sm:$0xff] %vm1428, %v1942
        %2013 = vst.msk [vmem:[%s216 + $0xb8] sm:$0xff] %vm1428, %v1947
        %2014 = vst.msk [vmem:[%s216 + $0xc0] sm:$0xff] %vm1428, %v1952
        %2015 = vst.msk [vmem:[%s216 + $0xc8] sm:$0xff] %vm1428, %v1957
        %2016 = vst.msk [vmem:[%s216 + $0xd0] sm:$0xff] %vm1428, %v1962
        %2017 = vst.msk [vmem:[%s216 + $0xd8] sm:$0xff] %vm1428, %v1967
        %2018 = vst.msk [vmem:[%s216 + $0xe0] sm:$0xff] %vm1428, %v1972
        %2019 = vst.msk [vmem:[%s216 + $0xe8] sm:$0xff] %vm1428, %v1977
        %2020 = vst.msk [vmem:[%s216 + $0xf0] sm:$0xff] %vm1428, %v1982
        %2021 = vst.msk [vmem:[%s216 + $0xf8] sm:$0xff] %vm1428, %v1987
        %v2022 = vsel %vm1428, %v1832, 0.0
        %v2023 = vsel %vm1428, %v1837, 0.0
        %v2024 = vadd.f32 %v2022, %v2023
        %v2025 = vsel %vm1428, %v1842, 0.0
        %v2026 = vadd.f32 %v2024, %v2025
        %v2027 = vsel %vm1428, %v1847, 0.0
        %v2028 = vadd.f32 %v2026, %v2027
        %v2029 = vsel %vm1428, %v1852, 0.0
        %v2030 = vadd.f32 %v2028, %v2029
        %v2031 = vsel %vm1428, %v1857, 0.0
        %v2032 = vadd.f32 %v2030, %v2031
        %v2033 = vsel %vm1428, %v1862, 0.0
        %v2034 = vadd.f32 %v2032, %v2033
        %v2035 = vsel %vm1428, %v1867, 0.0
        %v2036 = vadd.f32 %v2034, %v2035
        %v2037 = vsel %vm1428, %v1872, 0.0
        %v2038 = vadd.f32 %v2036, %v2037
        %v2039 = vsel %vm1428, %v1877, 0.0
        %v2040 = vadd.f32 %v2038, %v2039
        %v2041 = vsel %vm1428, %v1882, 0.0
        %v2042 = vadd.f32 %v2040, %v2041
        %v2043 = vsel %vm1428, %v1887, 0.0
        %v2044 = vadd.f32 %v2042, %v2043
        %v2045 = vsel %vm1428, %v1892, 0.0
        %v2046 = vadd.f32 %v2044, %v2045
        %v2047 = vsel %vm1428, %v1897, 0.0
        %v2048 = vadd.f32 %v2046, %v2047
        %v2049 = vsel %vm1428, %v1902, 0.0
        %v2050 = vadd.f32 %v2048, %v2049
        %v2051 = vsel %vm1428, %v1907, 0.0
        %v2052 = vadd.f32 %v2050, %v2051
        %v2053 = vsel %vm1428, %v1912, 0.0
        %v2054 = vadd.f32 %v2052, %v2053
        %v2055 = vsel %vm1428, %v1917, 0.0
        %v2056 = vadd.f32 %v2054, %v2055
        %v2057 = vsel %vm1428, %v1922, 0.0
        %v2058 = vadd.f32 %v2056, %v2057
        %v2059 = vsel %vm1428, %v1927, 0.0
        %v2060 = vadd.f32 %v2058, %v2059
        %v2061 = vsel %vm1428, %v1932, 0.0
        %v2062 = vadd.f32 %v2060, %v2061
        %v2063 = vsel %vm1428, %v1937, 0.0
        %v2064 = vadd.f32 %v2062, %v2063
        %v2065 = vsel %vm1428, %v1942, 0.0
        %v2066 = vadd.f32 %v2064, %v2065
        %v2067 = vsel %vm1428, %v1947, 0.0
        %v2068 = vadd.f32 %v2066, %v2067
        %v2069 = vsel %vm1428, %v1952, 0.0
        %v2070 = vadd.f32 %v2068, %v2069
        %v2071 = vsel %vm1428, %v1957, 0.0
        %v2072 = vadd.f32 %v2070, %v2071
        %v2073 = vsel %vm1428, %v1962, 0.0
        %v2074 = vadd.f32 %v2072, %v2073
        %v2075 = vsel %vm1428, %v1967, 0.0
        %v2076 = vadd.f32 %v2074, %v2075
        %v2077 = vsel %vm1428, %v1972, 0.0
        %v2078 = vadd.f32 %v2076, %v2077
        %v2079 = vsel %vm1428, %v1977, 0.0
        %v2080 = vadd.f32 %v2078, %v2079
        %v2081 = vsel %vm1428, %v1982, 0.0
        %v2082 = vadd.f32 %v2080, %v2081
        %v2083 = vsel %vm1428, %v1987, 0.0
        %v2084 = vadd.f32 %v2082, %v2083
        %v2085 = vrot.slane %v2084, 4
        %v2086 = vadd.f32 %v2084, %v2085
        %v2087 = vrot.slane %v2086, 2
        %v2088 = vadd.f32 %v2086, %v2087
        %v2089 = vrot.slane %v2088, 1
        %v2090 = vadd.f32 %v2088, %v2089
        %vm2091 = vcmask 57344
        %2092 = vst.msk [vmem:[%s200] sm:$0x1] %vm2091, %v2090
        %v2093 = vmul.f32 %v1832, %v1832
        %v2094 = vmul.f32 %v1837, %v1837
        %v2095 = vmul.f32 %v1842, %v1842
        %v2096 = vmul.f32 %v1847, %v1847
        %v2097 = vmul.f32 %v1852, %v1852
        %v2098 = vmul.f32 %v1857, %v1857
        %v2099 = vmul.f32 %v1862, %v1862
        %v2100 = vmul.f32 %v1867, %v1867
        %v2101 = vmul.f32 %v1872, %v1872
        %v2102 = vmul.f32 %v1877, %v1877
        %v2103 = vmul.f32 %v1882, %v1882
        %v2104 = vmul.f32 %v1887, %v1887
        %v2105 = vmul.f32 %v1892, %v1892
        %v2106 = vmul.f32 %v1897, %v1897
        %v2107 = vmul.f32 %v1902, %v1902
        %v2108 = vmul.f32 %v1907, %v1907
        %v2109 = vmul.f32 %v1912, %v1912
        %v2110 = vmul.f32 %v1917, %v1917
        %v2111 = vmul.f32 %v1922, %v1922
        %v2112 = vmul.f32 %v1927, %v1927
        %v2113 = vmul.f32 %v1932, %v1932
        %v2114 = vmul.f32 %v1937, %v1937
        %v2115 = vmul.f32 %v1942, %v1942
        %v2116 = vmul.f32 %v1947, %v1947
        %v2117 = vmul.f32 %v1952, %v1952
        %v2118 = vmul.f32 %v1957, %v1957
        %v2119 = vmul.f32 %v1962, %v1962
        %v2120 = vmul.f32 %v1967, %v1967
        %v2121 = vmul.f32 %v1972, %v1972
        %v2122 = vmul.f32 %v1977, %v1977
        %v2123 = vmul.f32 %v1982, %v1982
        %v2124 = vmul.f32 %v1987, %v1987
        %v2125 = vsel %vm1428, %v2093, 0.0
        %v2126 = vsel %vm1428, %v2094, 0.0
        %v2127 = vadd.f32 %v2125, %v2126
        %v2128 = vsel %vm1428, %v2095, 0.0
        %v2129 = vadd.f32 %v2127, %v2128
        %v2130 = vsel %vm1428, %v2096, 0.0
        %v2131 = vadd.f32 %v2129, %v2130
        %v2132 = vsel %vm1428, %v2097, 0.0
        %v2133 = vadd.f32 %v2131, %v2132
        %v2134 = vsel %vm1428, %v2098, 0.0
        %v2135 = vadd.f32 %v2133, %v2134
        %v2136 = vsel %vm1428, %v2099, 0.0
        %v2137 = vadd.f32 %v2135, %v2136
        %v2138 = vsel %vm1428, %v2100, 0.0
        %v2139 = vadd.f32 %v2137, %v2138
        %v2140 = vsel %vm1428, %v2101, 0.0
        %v2141 = vadd.f32 %v2139, %v2140
        %v2142 = vsel %vm1428, %v2102, 0.0
        %v2143 = vadd.f32 %v2141, %v2142
        %v2144 = vsel %vm1428, %v2103, 0.0
        %v2145 = vadd.f32 %v2143, %v2144
        %v2146 = vsel %vm1428, %v2104, 0.0
        %v2147 = vadd.f32 %v2145, %v2146
        %v2148 = vsel %vm1428, %v2105, 0.0
        %v2149 = vadd.f32 %v2147, %v2148
        %v2150 = vsel %vm1428, %v2106, 0.0
        %v2151 = vadd.f32 %v2149, %v2150
        %v2152 = vsel %vm1428, %v2107, 0.0
        %v2153 = vadd.f32 %v2151, %v2152
        %v2154 = vsel %vm1428, %v2108, 0.0
        %v2155 = vadd.f32 %v2153, %v2154
        %v2156 = vsel %vm1428, %v2109, 0.0
        %v2157 = vadd.f32 %v2155, %v2156
        %v2158 = vsel %vm1428, %v2110, 0.0
        %v2159 = vadd.f32 %v2157, %v2158
        %v2160 = vsel %vm1428, %v2111, 0.0
        %v2161 = vadd.f32 %v2159, %v2160
        %v2162 = vsel %vm1428, %v2112, 0.0
        %v2163 = vadd.f32 %v2161, %v2162
        %v2164 = vsel %vm1428, %v2113, 0.0
        %v2165 = vadd.f32 %v2163, %v2164
        %v2166 = vsel %vm1428, %v2114, 0.0
        %v2167 = vadd.f32 %v2165, %v2166
        %v2168 = vsel %vm1428, %v2115, 0.0
        %v2169 = vadd.f32 %v2167, %v2168
        %v2170 = vsel %vm1428, %v2116, 0.0
        %v2171 = vadd.f32 %v2169, %v2170
        %v2172 = vsel %vm1428, %v2117, 0.0
        %v2173 = vadd.f32 %v2171, %v2172
        %v2174 = vsel %vm1428, %v2118, 0.0
        %v2175 = vadd.f32 %v2173, %v2174
        %v2176 = vsel %vm1428, %v2119, 0.0
        %v2177 = vadd.f32 %v2175, %v2176
        %v2178 = vsel %vm1428, %v2120, 0.0
        %v2179 = vadd.f32 %v2177, %v2178
        %v2180 = vsel %vm1428, %v2121, 0.0
        %v2181 = vadd.f32 %v2179, %v2180
        %v2182 = vsel %vm1428, %v2122, 0.0
        %v2183 = vadd.f32 %v2181, %v2182
        %v2184 = vsel %vm1428, %v2123, 0.0
        %v2185 = vadd.f32 %v2183, %v2184
        %v2186 = vsel %vm1428, %v2124, 0.0
        %v2187 = vadd.f32 %v2185, %v2186
        %v2188 = vrot.slane %v2187, 4
        %v2189 = vadd.f32 %v2187, %v2188
        %v2190 = vrot.slane %v2189, 2
        %v2191 = vadd.f32 %v2189, %v2190
        %v2192 = vrot.slane %v2191, 1
        %v2193 = vadd.f32 %v2191, %v2192
        %2194 = vst.msk [vmem:[%s206] sm:$0x1] %vm2091, %v2193
        %p2195 = scmp.lt.s32.totalorder %s22, 1
        %s2196 = scalar_select %p2195, %s22, 1
        %s2197 = smul.addr %s2196, 32
        %s2198 = smul.addr %s2197, 8
        %s2199 = scalar_lea.vmem %s2, %s2198
        %s2200 = sand.u32 %s103, 1
        %s2201 = scalar_lea.sflag [#allocation4], %s2200
        %s2202 = sand.u32 %s103, 1
        %s2203 = scalar_lea.vmem [#allocation3], %s2202
        %s2204 = sand.u32 %s129, 1
        %s2205 = scalar_lea.sflag [#allocation6], %s2204
        %s2206 = sand.u32 %s129, 1
        %s2207 = scalar_lea.vmem [#allocation5], %s2206
        // Predicated region
        $region29: #{tpu_custom_call.1} parent=27 // pred_check
          %p2208 = pneg %p87
        $region30: #{tpu_custom_call.1} parent=27 // pred_check_branch
          %2210 = sbr.rel (%p2208) target = $region32
        $region31: #{tpu_custom_call.1} parent=27 // pred_region
          _
        $region32: #{tpu_custom_call.1} parent=27 // pred_fallthru
          _
        // Predicated region
        $region33: #{tpu_custom_call.1} parent=27 // pred_check
          %p2211 = pneg %p113
        $region34: #{tpu_custom_call.1} parent=27 // pred_check_branch
          %2213 = sbr.rel (%p2211) target = $region36
        $region35: #{tpu_custom_call.1} parent=27 // pred_region
          %s2215 = ssub.s32 16, 16
          %2216 = vsyncadd %s2201, %s2215
          %s2217 = smul.addr %s22, 16
          %s2218 = scalar_lea.hbm %s3, %s2217
          %s2220 = sshll.u32 %s2203, 4
          %s2221 = int_to_ptr.vmem [resolvable:$true] %s2220
          %2223 = dma.vmem_to_hbm [thread:$0]  %s2221, 16, %s2218, %s2201
        $region36: #{tpu_custom_call.1} parent=27 // pred_fallthru
          _
        // Predicated region
        $region37: #{tpu_custom_call.1} parent=27 // pred_check
          %p2224 = pneg %p139
        $region38: #{tpu_custom_call.1} parent=27 // pred_check_branch
          %2226 = sbr.rel (%p2224) target = $region40
        $region39: #{tpu_custom_call.1} parent=27 // pred_region
          %s2228 = ssub.s32 16, 16
          %2229 = vsyncadd %s2205, %s2228
          %s2230 = smul.addr %s22, 16
          %s2231 = scalar_lea.hbm %s4, %s2230
          %s2233 = sshll.u32 %s2207, 4
          %s2234 = int_to_ptr.vmem [resolvable:$true] %s2233
          %2236 = dma.vmem_to_hbm [thread:$0]  %s2234, 16, %s2231, %s2205
        $region40: #{tpu_custom_call.1} parent=27 // pred_fallthru
          _
      $region28: #{tpu_custom_call.1} parent=5 // pred_fallthru
        _
      %p2237 = scmp.le.s32.totalorder 2, %s17
      // Predicated region
      $region41: #{tpu_custom_call.1} parent=5 // pred_check
        %p2238 = pneg %p2237
      $region42: #{tpu_custom_call.1} parent=5 // pred_check_branch
        %2240 = sbr.rel (%p2238) target = $region44
      $region43: #{tpu_custom_call.1} parent=5 // pred_region
        %s2241 = ssub.s32 %s17, 2
        // Predicated region
        $region45: #{tpu_custom_call.1} parent=43 // pred_check
          %p2242 = pneg %p93
        $region46: #{tpu_custom_call.1} parent=43 // pred_check_branch
          %2244 = sbr.rel (%p2242) target = $region48
        $region47: #{tpu_custom_call.1} parent=43 // pred_region
          %p2245 = scmp.lt.s32.totalorder %s23, 1
          %s2246 = scalar_select %p2245, %s23, 1
          %s2247 = smul.addr %s2246, 32
          %s2248 = smul.addr %s2247, 8
          %s2249 = scalar_lea.vmem %s2, %s2248
        $region48: #{tpu_custom_call.1} parent=43 // pred_fallthru
          _
        // Predicated region
        $region49: #{tpu_custom_call.1} parent=43 // pred_check
          %p2250 = pneg %p119
        $region50: #{tpu_custom_call.1} parent=43 // pred_check_branch
          %2252 = sbr.rel (%p2250) target = $region52
        $region51: #{tpu_custom_call.1} parent=43 // pred_region
          %s2253 = sand.u32 %s104, 1
          %s2254 = scalar_lea.sflag [#allocation4], %s2253
          %s2255 = sand.u32 %s104, 1
          %s2256 = scalar_lea.vmem [#allocation3], %s2255
          %2257 = dma.done %s2254, 16
        $region52: #{tpu_custom_call.1} parent=43 // pred_fallthru
          _
        // Predicated region
        $region53: #{tpu_custom_call.1} parent=43 // pred_check
          %p2258 = pneg %p145
        $region54: #{tpu_custom_call.1} parent=43 // pred_check_branch
          %2260 = sbr.rel (%p2258) target = $region56
        $region55: #{tpu_custom_call.1} parent=43 // pred_region
          %s2261 = sand.u32 %s130, 1
          %s2262 = scalar_lea.sflag [#allocation6], %s2261
          %s2263 = sand.u32 %s130, 1
          %s2264 = scalar_lea.vmem [#allocation5], %s2263
          %2265 = dma.done %s2262, 16
        $region56: #{tpu_custom_call.1} parent=43 // pred_fallthru
          _
      $region44: #{tpu_custom_call.1} parent=5 // pred_fallthru
        _
    $region6: #{tpu_custom_call.1} parent=1 // loop_footer
      %s21 = sadd.s32 1, %s17
    $region7: #{tpu_custom_call.1} parent=1 // loop_footer_branch
      %16 = sbr.rel target = $region3
    $region8: #{tpu_custom_call.1} parent=1 // loop_exit
      _
    %2266 = vsyncpa [#allocation4], 1
    %s2267 = scalar_lea.sflag [#allocation4], 1
    %2268 = vsyncpa %s2267, 1
    %2269 = vsyncpa [#allocation6], 1
    %s2270 = scalar_lea.sflag [#allocation6], 1
    %2271 = vsyncpa %s2270, 1

</llo_original>
